<compile_context>
chip_gen: v7x
topology: tpu7x:2x2x1
jax: 0.10.0
libtpu: 0.0.40
codegen_flags: <defaults>
</compile_context>

<pallas_src>
import numpy as np

import jax
import jax.numpy as jnp
from jax import lax
from jax.experimental import pallas as pl
from jax.experimental.pallas import tpu as pltpu

_LANE = 128

_ACT = {
    "tanh": jnp.tanh,
    "relu": lambda v: jnp.maximum(v, 0.0),
    "identity": lambda v: v,
}


def _round_up(v, m):
    return (v + m - 1) // m * m


def _resident_map(ndim):
    # Whole-array block, resident across the batch grid (same block every step).
    return lambda i: (0,) * ndim


# ----------------------------------------------------------------------------
# Host-side (one-time) weight packing.
#
# Layout of every activation (and of the packed input):
#   slab[b, r*RW + x*C + c] == feature at (channel c, row r, col x),
#   where RW = round_up(W*C, 128) and lanes [W*C, RW) of each row are zero.
# Conv layer -> banded weight of shape (kh*RW_in, RW_out): one matmul per
# output row with K = kh*RW_in (the kh-row contiguous window).
# ----------------------------------------------------------------------------
def pack_params(params, *, in_channel, ny_size, nx_size, kernel_size, stride,
                compute_dtype=jnp.bfloat16):
    kh, kw = kernel_size
    s = stride
    arrays = []                      # flat (weight, bias, weight, bias, ...)
    H, W = ny_size, nx_size
    c_true = in_channel
    rw = _round_up(W * c_true, _LANE)
    layer_rw = [rw]
    layer_h = [H]

    # --- conv layers: fused-K banded per-row GEMM weights -------------------
    for (w, b) in params["conv"]:
        w = np.asarray(w, np.float32)            # (OC, IC, KH, KW) torch layout
        b = np.asarray(b, np.float32)
        oc, cin = w.shape[0], w.shape[1]
        assert cin == c_true, (cin, c_true)
        h_out = (H - kh) // s + 1
        w_out = (W - kw) // s + 1
        rw_out = _round_up(w_out * oc, _LANE)    # tight: pad only the row total
        # band[i*rw + x*cin + c, px*oc + o] = W[o, c, i, x - px*s] (zero else)
        band = np.zeros((kh * rw, rw_out), np.float32)
        for i in range(kh):
            for px in range(w_out):
                for j in range(kw):
                    xc = px * s + j
                    band[i * rw + xc * cin: i * rw + xc * cin + cin,
                         px * oc: px * oc + oc] = w[:, :, i, j].T
        bias_t = np.zeros((1, rw_out), np.float32)
        for px in range(w_out):
            bias_t[0, px * oc: px * oc + oc] = b
        arrays.append(jnp.asarray(band, compute_dtype))
        arrays.append(jnp.asarray(bias_t, jnp.float32))
        H, W, c_true, rw = h_out, w_out, oc, rw_out
        layer_rw.append(rw)
        layer_h.append(H)

    # --- first FC layer: consumes the per-row conv activations --------------
    fcs = params["fc"]
    w1 = np.asarray(fcs[0][0], np.float32)       # (N1, C*H*W) torch layout
    b1 = np.asarray(fcs[0][1], np.float32)
    n1, feat = w1.shape
    assert feat == c_true * H * W, (feat, c_true, H, W)
    n1p = _round_up(n1, _LANE)
    w1r = w1.reshape(n1, c_true, H, W)           # torch flatten order (c, h, w)
    w1rows = np.zeros((H, rw, n1p), np.float32)
    for oy in range(H):
        for px in range(W):
            w1rows[oy, px * c_true: (px + 1) * c_true, :n1] = w1r[:, :, oy, px].T
    b1p = np.zeros((1, n1p), np.float32)
    b1p[0, :n1] = b1
    arrays.append(jnp.asarray(w1rows, compute_dtype))
    arrays.append(jnp.asarray(b1p, jnp.float32))

    # --- remaining FC layers -------------------------------------------------
    nin_p = n1p
    for (w, b) in fcs[1:]:
        w = np.asarray(w, np.float32)            # (Nout, Nin) torch layout
        b = np.asarray(b, np.float32)
        nout, nin = w.shape
        noutp = _round_up(nout, _LANE)
        wp = np.zeros((nin_p, noutp), np.float32)
        wp[:nin, :nout] = w.T
        bp = np.zeros((1, noutp), np.float32)
        bp[0, :nout] = b
        arrays.append(jnp.asarray(wp, compute_dtype))
        arrays.append(jnp.asarray(bp, jnp.float32))
        nin_p = noutp

    meta = dict(n_conv=len(params["conv"]), n_fc=len(fcs),
                n_latent=int(np.asarray(fcs[-1][0]).shape[0]), n_out_pad=nin_p,
                layer_rw=layer_rw, layer_h=layer_h)
    return arrays, meta


# ----------------------------------------------------------------------------
# Fused Pallas kernel (whole network, one batch tile per grid step)
# ----------------------------------------------------------------------------
def _make_fused_kernel(*, kh, stride, n_conv, n_fc, n_scratch,
                       layer_rw, layer_h, act_conv, act_fc, compute_dtype):
    act_c = _ACT[act_conv]
    act_f = _ACT[act_fc]
    f32 = jnp.float32
    n_wb = 2 * (n_conv + n_fc)

    def kernel(x_ref, *rest):
        wb = rest[:n_wb]
        out_ref = rest[n_wb]
        scratches = rest[n_wb + 1:]
        tb = x_ref.shape[0]
        del tb  # shapes come from static metadata; tb only implicit in refs

        # ---- conv stack: one fused-K matmul per output row (all on-chip) ----
        src = x_ref                       # (TB, H_in * RW_in) lane-dense slab
        rw_in = layer_rw[0]
        for l in range(n_conv):
            w_ref, b_ref = wb[2 * l], wb[2 * l + 1]
            rw_out = layer_rw[l + 1]
            h_out = layer_h[l + 1]
            dst = scratches[l % n_scratch]
            # Hoist the bias load/cast (not the full (TB, rw_out) broadcast:
            # that would pin up to 64 vregs live across the row loop).
            bias = b_ref[...].astype(f32)                 # (1, rw_out)
            for oy in range(h_out):
                start = oy * stride * rw_in               # static, 128-aligned
                win = src[:, start:start + kh * rw_in]    # (TB, kh*rw_in) bf16
                z = jnp.dot(win, w_ref[...],
                            preferred_element_type=f32) + bias
                dst[:, oy * rw_out:(oy + 1) * rw_out] = (
                    act_c(z).astype(compute_dtype))
            src = dst
            rw_in = rw_out

        # ---- first FC layer: contract the per-row conv activations ----------
        h_rows = layer_h[n_conv]
        w_ref, b_ref = wb[2 * n_conv], wb[2 * n_conv + 1]
        acc = jnp.dot(src[:, 0:rw_in], w_ref[0], preferred_element_type=f32)
        for oy in range(1, h_rows):
            acc = acc + jnp.dot(src[:, oy * rw_in:(oy + 1) * rw_in], w_ref[oy],
                                preferred_element_type=f32)
        acc = acc + b_ref[...].astype(f32)
        h = acc if n_fc == 1 else act_f(acc)

        # ---- remaining FC layers (no activation on the last one) ------------
        for li in range(1, n_fc):
            w_ref, b_ref = wb[2 * (n_conv + li)], wb[2 * (n_conv + li) + 1]
            z = jnp.dot(h.astype(compute_dtype), w_ref[...],
                        preferred_element_type=f32) + b_ref[...].astype(f32)
            h = z if li == n_fc - 1 else act_f(z)

        out_ref[...] = h.astype(out_ref.dtype)

    return kernel


# ----------------------------------------------------------------------------
# Batch-tile selection: multiple of 16 (bf16 sublane pack), minimal padding,
# and >=2 grid steps when cheap so v7x's second TensorCore gets work.
# ----------------------------------------------------------------------------
def _choose_batch_tile(B):
    b16 = _round_up(B, 16)
    if b16 <= 128:
        if b16 >= 64 and b16 % 32 == 0:
            return b16 // 2, b16          # two grid steps, no extra padding
        return b16, b16
    best_tb, best_pad = 128, _round_up(B, 128)
    for tb in range(128, 63, -16):        # avoid ~2x padded work near edges
        bp = _round_up(B, tb)
        if bp < best_pad:
            best_tb, best_pad = tb, bp
    return best_tb, best_pad


# ----------------------------------------------------------------------------
# EncoderCNNet2d forward
# ----------------------------------------------------------------------------
def encoder_cnnet2d_forward(params, x, *, in_channel, ny_size, nx_size,
                            kernel_size=(5, 5), stride=3,
                            act_conv="tanh", act_fc="tanh",
                            compute_dtype=jnp.bfloat16):
    """x: (n_batch, my*mx, in_channel) -> beta: (n_batch, n_latent)."""
    kh, kw = kernel_size
    arrays, meta = pack_params(
        params, in_channel=in_channel, ny_size=ny_size, nx_size=nx_size,
        kernel_size=kernel_size, stride=stride, compute_dtype=compute_dtype)
    n_conv, n_fc = meta["n_conv"], meta["n_fc"]
    layer_rw, layer_h = meta["layer_rw"], meta["layer_h"]
    assert n_fc >= 1

    B = x.shape[0]
    # permute(0,2,1)+reshape to NCHW is equivalent (free) to the packed row
    # layout xp[b, y, x*C + c] == image[b, c, y, x]; pad each row to 128 lanes
    # and flatten so in-kernel row windows are contiguous lane slices.
    rw0 = layer_rw[0]
    xp = x.reshape(B, ny_size, nx_size * in_channel).astype(compute_dtype)
    if rw0 != nx_size * in_channel:
        xp = jnp.pad(xp, ((0, 0), (0, 0), (0, rw0 - nx_size * in_channel)))
    xp = xp.reshape(B, ny_size * rw0)

    TB, B_pad = _choose_batch_tile(B)
    if B_pad != B:
        xp = jnp.pad(xp, ((0, B_pad - B), (0, 0)))
    grid = (B_pad // TB,)

    in_specs = [pl.BlockSpec((TB, ny_size * rw0), lambda i: (i, 0))]
    for a in arrays:
        in_specs.append(pl.BlockSpec(a.shape, _resident_map(a.ndim)))

    n_out_pad = meta["n_out_pad"]
    out_spec = pl.BlockSpec((TB, n_out_pad), lambda i: (i, 0))
    out_shape = jax.ShapeDtypeStruct((B_pad, n_out_pad), jnp.float32)

    # Ping-pong VMEM scratch slabs for inter-layer activations.
    scratch_shapes = []
    scratch_sizes = []
    n_scratch = 0
    if n_conv >= 1:
        n_scratch = 1 if n_conv == 1 else 2
        for j in range(n_scratch):
            sz = max(layer_h[l + 1] * layer_rw[l + 1]
                     for l in range(n_conv) if l % n_scratch == j)
            scratch_shapes.append(pltpu.VMEM((TB, sz), compute_dtype))
            scratch_sizes.append(sz)

    kernel = _make_fused_kernel(
        kh=kh, stride=stride, n_conv=n_conv, n_fc=n_fc, n_scratch=n_scratch,
        layer_rw=layer_rw, layer_h=layer_h, act_conv=act_conv, act_fc=act_fc,
        compute_dtype=compute_dtype)

    # Explicit VMEM budget (resident weights are double-buffered by Pallas;
    # v5e's default scoped limit is 16 MiB, v7x has 64 MiB physical per TC).
    itm = jnp.dtype(compute_dtype).itemsize
    weight_bytes = sum(int(a.size) * a.dtype.itemsize for a in arrays)
    in_block_bytes = TB * ny_size * rw0 * itm
    out_block_bytes = TB * n_out_pad * 4
    scratch_bytes = sum(TB * s * itm for s in scratch_sizes)
    needed = (2 * weight_bytes + 2 * in_block_bytes + 2 * out_block_bytes
              + scratch_bytes + (2 << 20))
    try:
        cap = int(pltpu.get_tpu_info().vmem_capacity_bytes)
    except Exception:
        cap = 64 << 20
    vmem_limit = int(min(max(needed, 32 << 20), int(cap * 0.85)))

    # Advisory cost estimate so XLA can schedule around the custom call.
    flops, transc = 0, 0
    Hh, Ww, cin = ny_size, nx_size, in_channel
    for (w, _) in params["conv"]:
        oc = w.shape[0]
        ho, wo = (Hh - kh) // stride + 1, (Ww - kw) // stride + 1
        flops += 2 * ho * wo * kh * kw * cin * oc
        transc += ho * wo * oc
        Hh, Ww, cin = ho, wo, oc
    for li, (w, _) in enumerate(params["fc"]):
        nout, nin = w.shape
        flops += 2 * nin * nout
        if li < len(params["fc"]) - 1:
            transc += nout
    bytes_acc = (int(xp.size) * xp.dtype.itemsize + weight_bytes
                 + B_pad * n_out_pad * 4)
    cost = pl.CostEstimate(flops=int(flops * B_pad),
                           transcendentals=int(transc * B_pad),
                           bytes_accessed=int(bytes_acc))

    y = pl.pallas_call(
        kernel,
        out_shape=out_shape,
        grid=grid,
        in_specs=in_specs,
        out_specs=out_spec,
        scratch_shapes=tuple(scratch_shapes),
        compiler_params=pltpu.CompilerParams(
            dimension_semantics=("parallel",),
            vmem_limit_bytes=vmem_limit),
        cost_estimate=cost,
    )(xp, *arrays)

    return y[:B, :meta["n_latent"]]


# ----------------------------------------------------------------------------
# Pure-JAX reference of the same module semantics (for a correctness check)
# ----------------------------------------------------------------------------
def reference_forward(params, x, *, in_channel, ny_size, nx_size,
                      kernel_size=(5, 5), stride=3,
                      act_conv="tanh", act_fc="tanh"):
    B = x.shape[0]
    h = jnp.transpose(x, (0, 2, 1)).reshape(B, in_channel, ny_size, nx_size)
    for (w, b) in params["conv"]:
        h = lax.conv_general_dilated(h, w, (stride, stride), "VALID",
                                     dimension_numbers=("NCHW", "OIHW", "NCHW"))
        h = _ACT[act_conv](h + b.reshape(1, -1, 1, 1))
    h = h.reshape(B, -1)
    fcs = params["fc"]
    for li, (w, b) in enumerate(fcs):
        h = h @ w.T + b
        if li < len(fcs) - 1:
            h = _ACT[act_fc](h)
    return h


# ----------------------------------------------------------------------------
# Deterministic parameter init (synthetic weights, torch layouts)
# ----------------------------------------------------------------------------
def init_params(key, conv_arch, fc_arch, kernel_size):
    params = {"conv": [], "fc": []}
    kh, kw = kernel_size
    for cin, cout in zip(conv_arch[:-1], conv_arch[1:]):
        key, kw_, kb_ = jax.random.split(key, 3)
        w = 0.1 * jax.random.normal(kw_, (cout, cin, kh, kw), jnp.float32)
        b = 0.1 * jax.random.normal(kb_, (cout,), jnp.float32)
        params["conv"].append((w, b))
    for fin, fout in zip(fc_arch[:-1], fc_arch[1:]):
        key, kw_, kb_ = jax.random.split(key, 3)
        w = 0.1 * jax.random.normal(kw_, (fout, fin), jnp.float32)
        b = 0.1 * jax.random.normal(kb_, (fout,), jnp.float32)
        params["fc"].append((w, b))
    return params


if __name__ == "__main__":
    # Small, module-consistent configuration
    in_channel = 4
    nx_size, ny_size = 16, 16
    kernel_size, stride = (5, 5), 3
    conv_arch = [in_channel, 8]            # 16x16 -> 4x4 spatial after the conv
    fc_arch = [8 * 4 * 4, 32, 8]           # flatten 128 -> 32 -> n_latent=8
    batch = 2

    key = jax.random.PRNGKey(0)
    key_p, key_x = jax.random.split(key)
    params = init_params(key_p, conv_arch, fc_arch, kernel_size)

    # Module input: (n_batch, my*mx, in_channel)
    x = jax.random.normal(key_x, (batch, ny_size * nx_size, in_channel),
                          jnp.float32)

    beta = encoder_cnnet2d_forward(
        params, x,
        in_channel=in_channel, ny_size=ny_size, nx_size=nx_size,
        kernel_size=kernel_size, stride=stride,
        act_conv="tanh", act_fc="tanh",
    )
    beta = jax.block_until_ready(beta)
    assert beta.shape == (batch, fc_arch[-1]), beta.shape
    assert bool(jnp.all(jnp.isfinite(beta)))

    # Cross-check the fused kernel against the pure-JAX reference
    # (bf16 operands / inter-layer bf16 casts in the kernel -> loose tolerance).
    ref = jax.block_until_ready(reference_forward(
        params, x,
        in_channel=in_channel, ny_size=ny_size, nx_size=nx_size,
        kernel_size=kernel_size, stride=stride,
        act_conv="tanh", act_fc="tanh"))
    assert bool(jnp.allclose(beta, ref, atol=5e-2, rtol=5e-2)), (
        float(jnp.max(jnp.abs(beta - ref))))

    print("KERNEL_OK")
</pallas_src>

<mosaic_0001>
module attributes {stable_mosaic.version = 11 : i64} {
  func.func @kernel(%arg0: i32, %arg1: memref<16x2048xbf16, #tpu.memory_space<vmem>>, %arg2: memref<640x128xbf16, #tpu.memory_space<vmem>>, %arg3: memref<1x128xf32, #tpu.memory_space<vmem>>, %arg4: memref<4x128x128xbf16, #tpu.memory_space<vmem>>, %arg5: memref<1x128xf32, #tpu.memory_space<vmem>>, %arg6: memref<128x128xbf16, #tpu.memory_space<vmem>>, %arg7: memref<1x128xf32, #tpu.memory_space<vmem>>, %arg8: memref<16x128xf32, #tpu.memory_space<vmem>>, %arg9: memref<16x512xbf16, #tpu.memory_space<vmem>>) attributes {dimension_semantics = [#tpu.dimension_semantics<parallel>], iteration_bounds = array<i64: 1>, scalar_prefetch = 0 : i64, scratch_operands = 1 : i64, tpu.core_type = #tpu.core_type<tc>, window_params = [{transform_indices = @transform_0, window_bounds = array<i64: 16, 2048>}, {pipeline_mode = #tpu.pipeline_mode<synchronous>, transform_indices = @transform_1, window_bounds = array<i64: 640, 128>}, {pipeline_mode = #tpu.pipeline_mode<synchronous>, transform_indices = @transform_2, window_bounds = array<i64: 1, 128>}, {pipeline_mode = #tpu.pipeline_mode<synchronous>, transform_indices = @transform_3, window_bounds = array<i64: 4, 128, 128>}, {pipeline_mode = #tpu.pipeline_mode<synchronous>, transform_indices = @transform_4, window_bounds = array<i64: 1, 128>}, {pipeline_mode = #tpu.pipeline_mode<synchronous>, transform_indices = @transform_5, window_bounds = array<i64: 128, 128>}, {pipeline_mode = #tpu.pipeline_mode<synchronous>, transform_indices = @transform_6, window_bounds = array<i64: 1, 128>}, {transform_indices = @transform_7, window_bounds = array<i64: 16, 128>}]} {
    %c0 = arith.constant 0 : index
    %c0_0 = arith.constant 0 : index
    %0 = vector.load %arg3[%c0, %c0_0] : memref<1x128xf32, #tpu.memory_space<vmem>>, vector<1x128xf32>
    %c0_1 = arith.constant 0 : index
    %c0_2 = arith.constant 0 : index
    %1 = vector.load %arg1[%c0_1, %c0_2] : memref<16x2048xbf16, #tpu.memory_space<vmem>>, vector<16x640xbf16>
    %c0_3 = arith.constant 0 : index
    %c0_4 = arith.constant 0 : index
    %2 = vector.load %arg2[%c0_3, %c0_4] : memref<640x128xbf16, #tpu.memory_space<vmem>>, vector<640x128xbf16>
    %cst = arith.constant dense<0.000000e+00> : vector<16x128xf32>
    %3 = tpu.matmul %1, %2, %cst {dimension_numbers = #tpu.dot_dimension_numbers<[1], [0], [0], [1], [0, 0, 1, 1], [], []>} : vector<16x640xbf16>, vector<640x128xbf16>, vector<16x128xf32> -> vector<16x128xf32>
    %4 = vector.broadcast %0 : vector<1x128xf32> to vector<16x128xf32>
    %5 = arith.addf %3, %4 : vector<16x128xf32>
    %6 = math.tanh %5 : vector<16x128xf32>
    %7 = arith.truncf %6 : vector<16x128xf32> to vector<16x128xbf16>
    %c0_5 = arith.constant 0 : index
    %c0_6 = arith.constant 0 : index
    %8 = vector.load %arg9[%c0_5, %c0_6] : memref<16x512xbf16, #tpu.memory_space<vmem>>, vector<16x128xbf16>
    tpu.vector_store %arg9[%c0_5, %c0_6], %7 {strides = array<i32>} : memref<16x512xbf16, #tpu.memory_space<vmem>>, vector<16x128xbf16>,
    %c0_7 = arith.constant 0 : index
    %c384 = arith.constant 384 : index
    %9 = vector.load %arg1[%c0_7, %c384] : memref<16x2048xbf16, #tpu.memory_space<vmem>>, vector<16x640xbf16>
    %c0_8 = arith.constant 0 : index
    %c0_9 = arith.constant 0 : index
    %10 = vector.load %arg2[%c0_8, %c0_9] : memref<640x128xbf16, #tpu.memory_space<vmem>>, vector<640x128xbf16>
    %cst_10 = arith.constant dense<0.000000e+00> : vector<16x128xf32>
    %11 = tpu.matmul %9, %10, %cst_10 {dimension_numbers = #tpu.dot_dimension_numbers<[1], [0], [0], [1], [0, 0, 1, 1], [], []>} : vector<16x640xbf16>, vector<640x128xbf16>, vector<16x128xf32> -> vector<16x128xf32>
    %12 = vector.broadcast %0 : vector<1x128xf32> to vector<16x128xf32>
    %13 = arith.addf %11, %12 : vector<16x128xf32>
    %14 = math.tanh %13 : vector<16x128xf32>
    %15 = arith.truncf %14 : vector<16x128xf32> to vector<16x128xbf16>
    %c0_11 = arith.constant 0 : index
    %c128 = arith.constant 128 : index
    %16 = vector.load %arg9[%c0_11, %c128] : memref<16x512xbf16, #tpu.memory_space<vmem>>, vector<16x128xbf16>
    tpu.vector_store %arg9[%c0_11, %c128], %15 {strides = array<i32>} : memref<16x512xbf16, #tpu.memory_space<vmem>>, vector<16x128xbf16>,
    %c0_12 = arith.constant 0 : index
    %c768 = arith.constant 768 : index
    %17 = vector.load %arg1[%c0_12, %c768] : memref<16x2048xbf16, #tpu.memory_space<vmem>>, vector<16x640xbf16>
    %c0_13 = arith.constant 0 : index
    %c0_14 = arith.constant 0 : index
    %18 = vector.load %arg2[%c0_13, %c0_14] : memref<640x128xbf16, #tpu.memory_space<vmem>>, vector<640x128xbf16>
    %cst_15 = arith.constant dense<0.000000e+00> : vector<16x128xf32>
    %19 = tpu.matmul %17, %18, %cst_15 {dimension_numbers = #tpu.dot_dimension_numbers<[1], [0], [0], [1], [0, 0, 1, 1], [], []>} : vector<16x640xbf16>, vector<640x128xbf16>, vector<16x128xf32> -> vector<16x128xf32>
    %20 = vector.broadcast %0 : vector<1x128xf32> to vector<16x128xf32>
    %21 = arith.addf %19, %20 : vector<16x128xf32>
    %22 = math.tanh %21 : vector<16x128xf32>
    %23 = arith.truncf %22 : vector<16x128xf32> to vector<16x128xbf16>
    %c0_16 = arith.constant 0 : index
    %c256 = arith.constant 256 : index
    %24 = vector.load %arg9[%c0_16, %c256] : memref<16x512xbf16, #tpu.memory_space<vmem>>, vector<16x128xbf16>
    tpu.vector_store %arg9[%c0_16, %c256], %23 {strides = array<i32>} : memref<16x512xbf16, #tpu.memory_space<vmem>>, vector<16x128xbf16>,
    %c0_17 = arith.constant 0 : index
    %c1152 = arith.constant 1152 : index
    %25 = vector.load %arg1[%c0_17, %c1152] : memref<16x2048xbf16, #tpu.memory_space<vmem>>, vector<16x640xbf16>
    %c0_18 = arith.constant 0 : index
    %c0_19 = arith.constant 0 : index
    %26 = vector.load %arg2[%c0_18, %c0_19] : memref<640x128xbf16, #tpu.memory_space<vmem>>, vector<640x128xbf16>
    %cst_20 = arith.constant dense<0.000000e+00> : vector<16x128xf32>
    %27 = tpu.matmul %25, %26, %cst_20 {dimension_numbers = #tpu.dot_dimension_numbers<[1], [0], [0], [1], [0, 0, 1, 1], [], []>} : vector<16x640xbf16>, vector<640x128xbf16>, vector<16x128xf32> -> vector<16x128xf32>
    %28 = vector.broadcast %0 : vector<1x128xf32> to vector<16x128xf32>
    %29 = arith.addf %27, %28 : vector<16x128xf32>
    %30 = math.tanh %29 : vector<16x128xf32>
    %31 = arith.truncf %30 : vector<16x128xf32> to vector<16x128xbf16>
    %c0_21 = arith.constant 0 : index
    %c384_22 = arith.constant 384 : index
    %32 = vector.load %arg9[%c0_21, %c384_22] : memref<16x512xbf16, #tpu.memory_space<vmem>>, vector<16x128xbf16>
    tpu.vector_store %arg9[%c0_21, %c384_22], %31 {strides = array<i32>} : memref<16x512xbf16, #tpu.memory_space<vmem>>, vector<16x128xbf16>,
    %c0_23 = arith.constant 0 : index
    %c0_24 = arith.constant 0 : index
    %33 = vector.load %arg9[%c0_23, %c0_24] : memref<16x512xbf16, #tpu.memory_space<vmem>>, vector<16x128xbf16>
    %c0_25 = arith.constant 0 : index
    %c0_26 = arith.constant 0 : index
    %c0_27 = arith.constant 0 : index
    %34 = vector.load %arg4[%c0_25, %c0_26, %c0_27] : memref<4x128x128xbf16, #tpu.memory_space<vmem>>, vector<1x128x128xbf16>
    %35 = vector.shape_cast %34 : vector<1x128x128xbf16> to vector<128x128xbf16>
    %cst_28 = arith.constant dense<0.000000e+00> : vector<16x128xf32>
    %36 = tpu.matmul %33, %35, %cst_28 {dimension_numbers = #tpu.dot_dimension_numbers<[1], [0], [0], [1], [0, 0, 1, 1], [], []>} : vector<16x128xbf16>, vector<128x128xbf16>, vector<16x128xf32> -> vector<16x128xf32>
    %c0_29 = arith.constant 0 : index
    %c128_30 = arith.constant 128 : index
    %37 = vector.load %arg9[%c0_29, %c128_30] : memref<16x512xbf16, #tpu.memory_space<vmem>>, vector<16x128xbf16>
    %c1 = arith.constant 1 : index
    %c0_31 = arith.constant 0 : index
    %c0_32 = arith.constant 0 : index
    %38 = vector.load %arg4[%c1, %c0_31, %c0_32] : memref<4x128x128xbf16, #tpu.memory_space<vmem>>, vector<1x128x128xbf16>
    %39 = vector.shape_cast %38 : vector<1x128x128xbf16> to vector<128x128xbf16>
    %cst_33 = arith.constant dense<0.000000e+00> : vector<16x128xf32>
    %40 = tpu.matmul %37, %39, %cst_33 {dimension_numbers = #tpu.dot_dimension_numbers<[1], [0], [0], [1], [0, 0, 1, 1], [], []>} : vector<16x128xbf16>, vector<128x128xbf16>, vector<16x128xf32> -> vector<16x128xf32>
    %41 = arith.addf %36, %40 : vector<16x128xf32>
    %c0_34 = arith.constant 0 : index
    %c256_35 = arith.constant 256 : index
    %42 = vector.load %arg9[%c0_34, %c256_35] : memref<16x512xbf16, #tpu.memory_space<vmem>>, vector<16x128xbf16>
    %c2 = arith.constant 2 : index
    %c0_36 = arith.constant 0 : index
    %c0_37 = arith.constant 0 : index
    %43 = vector.load %arg4[%c2, %c0_36, %c0_37] : memref<4x128x128xbf16, #tpu.memory_space<vmem>>, vector<1x128x128xbf16>
    %44 = vector.shape_cast %43 : vector<1x128x128xbf16> to vector<128x128xbf16>
    %cst_38 = arith.constant dense<0.000000e+00> : vector<16x128xf32>
    %45 = tpu.matmul %42, %44, %cst_38 {dimension_numbers = #tpu.dot_dimension_numbers<[1], [0], [0], [1], [0, 0, 1, 1], [], []>} : vector<16x128xbf16>, vector<128x128xbf16>, vector<16x128xf32> -> vector<16x128xf32>
    %46 = arith.addf %41, %45 : vector<16x128xf32>
    %c0_39 = arith.constant 0 : index
    %c384_40 = arith.constant 384 : index
    %47 = vector.load %arg9[%c0_39, %c384_40] : memref<16x512xbf16, #tpu.memory_space<vmem>>, vector<16x128xbf16>
    %c3 = arith.constant 3 : index
    %c0_41 = arith.constant 0 : index
    %c0_42 = arith.constant 0 : index
    %48 = vector.load %arg4[%c3, %c0_41, %c0_42] : memref<4x128x128xbf16, #tpu.memory_space<vmem>>, vector<1x128x128xbf16>
    %49 = vector.shape_cast %48 : vector<1x128x128xbf16> to vector<128x128xbf16>
    %cst_43 = arith.constant dense<0.000000e+00> : vector<16x128xf32>
    %50 = tpu.matmul %47, %49, %cst_43 {dimension_numbers = #tpu.dot_dimension_numbers<[1], [0], [0], [1], [0, 0, 1, 1], [], []>} : vector<16x128xbf16>, vector<128x128xbf16>, vector<16x128xf32> -> vector<16x128xf32>
    %51 = arith.addf %46, %50 : vector<16x128xf32>
    %c0_44 = arith.constant 0 : index
    %c0_45 = arith.constant 0 : index
    %52 = vector.load %arg5[%c0_44, %c0_45] : memref<1x128xf32, #tpu.memory_space<vmem>>, vector<1x128xf32>
    %53 = vector.broadcast %52 : vector<1x128xf32> to vector<16x128xf32>
    %54 = arith.addf %51, %53 : vector<16x128xf32>
    %55 = math.tanh %54 : vector<16x128xf32>
    %56 = arith.truncf %55 : vector<16x128xf32> to vector<16x128xbf16>
    %c0_46 = arith.constant 0 : index
    %c0_47 = arith.constant 0 : index
    %57 = vector.load %arg6[%c0_46, %c0_47] : memref<128x128xbf16, #tpu.memory_space<vmem>>, vector<128x128xbf16>
    %cst_48 = arith.constant dense<0.000000e+00> : vector<16x128xf32>
    %58 = tpu.matmul %56, %57, %cst_48 {dimension_numbers = #tpu.dot_dimension_numbers<[1], [0], [0], [1], [0, 0, 1, 1], [], []>} : vector<16x128xbf16>, vector<128x128xbf16>, vector<16x128xf32> -> vector<16x128xf32>
    %c0_49 = arith.constant 0 : index
    %c0_50 = arith.constant 0 : index
    %59 = vector.load %arg7[%c0_49, %c0_50] : memref<1x128xf32, #tpu.memory_space<vmem>>, vector<1x128xf32>
    %60 = vector.broadcast %59 : vector<1x128xf32> to vector<16x128xf32>
    %61 = arith.addf %58, %60 : vector<16x128xf32>
    %c0_51 = arith.constant 0 : index
    %c0_52 = arith.constant 0 : index
    %62 = vector.load %arg8[%c0_51, %c0_52] : memref<16x128xf32, #tpu.memory_space<vmem>>, vector<16x128xf32>
    tpu.vector_store %arg8[%c0_51, %c0_52], %61 {strides = array<i32>} : memref<16x128xf32, #tpu.memory_space<vmem>>, vector<16x128xf32>,
    return
  }
  func.func @transform_0(%arg0: i32) -> (i32, i32) {
    %c0_i32 = arith.constant 0 : i32
    %c0_i32_0 = arith.constant 0 : i32
    return %arg0, %c0_i32 : i32, i32
  }
  func.func @transform_1(%arg0: i32) -> (i32, i32) {
    %c0_i32 = arith.constant 0 : i32
    %c0_i32_0 = arith.constant 0 : i32
    %c0_i32_1 = arith.constant 0 : i32
    return %c0_i32, %c0_i32_0 : i32, i32
  }
  func.func @transform_2(%arg0: i32) -> (i32, i32) {
    %c0_i32 = arith.constant 0 : i32
    %c0_i32_0 = arith.constant 0 : i32
    %c0_i32_1 = arith.constant 0 : i32
    return %c0_i32, %c0_i32_0 : i32, i32
  }
  func.func @transform_3(%arg0: i32) -> (i32, i32, i32) {
    %c0_i32 = arith.constant 0 : i32
    %c0_i32_0 = arith.constant 0 : i32
    %c0_i32_1 = arith.constant 0 : i32
    %c0_i32_2 = arith.constant 0 : i32
    return %c0_i32, %c0_i32_0, %c0_i32_1 : i32, i32, i32
  }
  func.func @transform_4(%arg0: i32) -> (i32, i32) {
    %c0_i32 = arith.constant 0 : i32
    %c0_i32_0 = arith.constant 0 : i32
    %c0_i32_1 = arith.constant 0 : i32
    return %c0_i32, %c0_i32_0 : i32, i32
  }
  func.func @transform_5(%arg0: i32) -> (i32, i32) {
    %c0_i32 = arith.constant 0 : i32
    %c0_i32_0 = arith.constant 0 : i32
    %c0_i32_1 = arith.constant 0 : i32
    return %c0_i32, %c0_i32_0 : i32, i32
  }
  func.func @transform_6(%arg0: i32) -> (i32, i32) {
    %c0_i32 = arith.constant 0 : i32
    %c0_i32_0 = arith.constant 0 : i32
    %c0_i32_1 = arith.constant 0 : i32
    return %c0_i32, %c0_i32_0 : i32, i32
  }
  func.func @transform_7(%arg0: i32) -> (i32, i32) {
    %c0_i32 = arith.constant 0 : i32
    %c0_i32_0 = arith.constant 0 : i32
    return %arg0, %c0_i32 : i32, i32
  }
}

</mosaic_0001>

<llo_original>
// kernel: tpu_custom_call.1
$region0: #{tpu_custom_call.1}
  #allocation0 [shape = 'u32[]', space=smem, size = 0x4, offset = 0x4, fixed_abs, tag = 'smem constant byte address 0x4 - core index']
  #allocation1 [shape = 'u32[144,128]{1,0:T(1,128)}', space=vmem, size = 0x12000, scoped, tag = 'internal scratch']
  #allocation2 [shape = 'bf16[16,512]{1,0:T(16,128)(2,1)}', space=vmem, size = 0x4000, scoped, tag = 'scratch operand']
  %s0 = inlined_call_operand.hbm [shape: bf16[16,2048], index: 0, kind: input, shape index: {}]
  %s1 = inlined_call_operand.hbm [shape: bf16[640,128], index: 1, kind: input, shape index: {}]
  %s2 = inlined_call_operand.vmem [shape: f32[1,128], index: 2, kind: input, shape index: {}]
  %s3 = inlined_call_operand.hbm [shape: bf16[4,128,128], index: 3, kind: input, shape index: {}]
  %s4 = inlined_call_operand.vmem [shape: f32[1,128], index: 4, kind: input, shape index: {}]
  %s5 = inlined_call_operand.hbm [shape: bf16[128,128], index: 5, kind: input, shape index: {}]
  %s6 = inlined_call_operand.vmem [shape: f32[1,128], index: 6, kind: input, shape index: {}]
  %s7 = inlined_call_operand.hbm [shape: f32[16,128], index: 7, kind: output, shape index: {}]
  %s8 = sld [smem:[#allocation0]]
  $region54: #{tpu_custom_call.1} parent=0
    _
  %s10 = ssub.s32 1, %s8
  %s11 = scalar_select 0, %s10, %s8
  $region1: #{tpu_custom_call.1} parent=0
    #allocation3 [shape = 'u8[65536]{0}', space=vmem, size = 0x10000, scoped, tag = 'input window, operand 0, single buffered']
    #allocation4 [shape = 's32[1]{0}', space=sflag, size = 0x4, scoped, tag = 'scoped memory for tpu_custom_call.1']
    #allocation5 [shape = 's32[1]{0}', space=sflag, size = 0x4, scoped, tag = 'scoped memory for tpu_custom_call.1']
    #allocation6 [shape = 'u8[163840]{0}', space=vmem, size = 0x28000, scoped, tag = 'input window, operand 1, single buffered']
    #allocation7 [shape = 's32[1]{0}', space=sflag, size = 0x4, scoped, tag = 'scoped memory for tpu_custom_call.1']
    #allocation8 [shape = 'u8[131072]{0}', space=vmem, size = 0x20000, scoped, tag = 'input window, operand 3, single buffered']
    #allocation9 [shape = 'u8[32768]{0}', space=vmem, size = 0x8000, scoped, tag = 'input window, operand 5, single buffered']
    #allocation10 [shape = 's32[1]{0}', space=sflag, size = 0x4, scoped, tag = 'scoped memory for tpu_custom_call.1']
    #allocation11 [shape = 'u8[8192]{0}', space=vmem, size = 0x2000, scoped, tag = 'output window, operand 0, single buffered']
    %12 = vsyncpa [#allocation4], 0
    %13 = vsyncpa [#allocation7], 0
    %14 = vsyncpa [#allocation10], 0
    %15 = vsyncpa [#allocation5], 0
    // Predicated region
    $region2: #{tpu_custom_call.1} parent=1 // pred_check
      _
    $region3: #{tpu_custom_call.1} parent=1 // pred_check_branch
      %17 = sbr.rel (0) target = $region5
    $region4: #{tpu_custom_call.1} parent=1 // pred_region
      %s19 = ssub.s32 2048, 2048
      %20 = vsyncadd [#allocation4], %s19
      %s21 = sshll.u32 [#allocation3], 4
      %s22 = int_to_ptr.vmem [resolvable:$true] %s21
      %27 = dma.hbm_to_vmem [thread:$0]  %s0, 2048, %s22, [#allocation4], 1024, 1024, 64
    $region5: #{tpu_custom_call.1} parent=1 // pred_fallthru
      _
    // Predicated region
    $region6: #{tpu_custom_call.1} parent=1 // pred_check
      _
    $region7: #{tpu_custom_call.1} parent=1 // pred_check_branch
      %29 = sbr.rel (0) target = $region9
    $region8: #{tpu_custom_call.1} parent=1 // pred_region
      %s31 = ssub.s32 5120, 5120
      %32 = vsyncadd [#allocation7], %s31
      %s33 = sshll.u32 [#allocation6], 4
      %s34 = int_to_ptr.vmem [resolvable:$true] %s33
      %39 = dma.hbm_to_vmem [thread:$0]  %s1, 5120, %s34, [#allocation7], 64, 64, 4
    $region9: #{tpu_custom_call.1} parent=1 // pred_fallthru
      _
    // Predicated region
    $region10: #{tpu_custom_call.1} parent=1 // pred_check
      _
    $region11: #{tpu_custom_call.1} parent=1 // pred_check_branch
      %41 = sbr.rel (0) target = $region13
    $region12: #{tpu_custom_call.1} parent=1 // pred_region
      _
    $region13: #{tpu_custom_call.1} parent=1 // pred_fallthru
      _
    // Predicated region
    $region14: #{tpu_custom_call.1} parent=1 // pred_check
      _
    $region15: #{tpu_custom_call.1} parent=1 // pred_check_branch
      %43 = sbr.rel (0) target = $region17
    $region16: #{tpu_custom_call.1} parent=1 // pred_region
      %s45 = ssub.s32 4096, 4096
      %46 = vsyncadd [#allocation7], %s45
      %s47 = sshll.u32 [#allocation8], 4
      %s48 = int_to_ptr.vmem [resolvable:$true] %s47
      %53 = dma.hbm_to_vmem [thread:$0]  %s3, 4096, %s48, [#allocation7], 64, 64, 4
    $region17: #{tpu_custom_call.1} parent=1 // pred_fallthru
      _
    // Predicated region
    $region18: #{tpu_custom_call.1} parent=1 // pred_check
      _
    $region19: #{tpu_custom_call.1} parent=1 // pred_check_branch
      %55 = sbr.rel (0) target = $region21
    $region20: #{tpu_custom_call.1} parent=1 // pred_region
      _
    $region21: #{tpu_custom_call.1} parent=1 // pred_fallthru
      _
    // Predicated region
    $region22: #{tpu_custom_call.1} parent=1 // pred_check
      _
    $region23: #{tpu_custom_call.1} parent=1 // pred_check_branch
      %57 = sbr.rel (0) target = $region25
    $region24: #{tpu_custom_call.1} parent=1 // pred_region
      %s59 = ssub.s32 1024, 1024
      %60 = vsyncadd [#allocation10], %s59
      %s61 = sshll.u32 [#allocation9], 4
      %s62 = int_to_ptr.vmem [resolvable:$true] %s61
      %67 = dma.hbm_to_vmem [thread:$0]  %s5, 1024, %s62, [#allocation10], 64, 64, 4
    $region25: #{tpu_custom_call.1} parent=1 // pred_fallthru
      _
    // Predicated region
    $region26: #{tpu_custom_call.1} parent=1 // pred_check
      _
    $region27: #{tpu_custom_call.1} parent=1 // pred_check_branch
      %69 = sbr.rel (0) target = $region29
    $region28: #{tpu_custom_call.1} parent=1 // pred_region
      _
    $region29: #{tpu_custom_call.1} parent=1 // pred_fallthru
      _
    // Predicated region
    $region30: #{tpu_custom_call.1} parent=1 // pred_check
      _
    $region31: #{tpu_custom_call.1} parent=1 // pred_check_branch
      %71 = sbr.rel (0) target = $region33
    $region32: #{tpu_custom_call.1} parent=1 // pred_region
      %72 = dma.done [#allocation4], 2048
    $region33: #{tpu_custom_call.1} parent=1 // pred_fallthru
      _
    // Predicated region
    $region34: #{tpu_custom_call.1} parent=1 // pred_check
      _
    $region35: #{tpu_custom_call.1} parent=1 // pred_check_branch
      %74 = sbr.rel (0) target = $region37
    $region36: #{tpu_custom_call.1} parent=1 // pred_region
      %75 = dma.done [#allocation7], 5120
    $region37: #{tpu_custom_call.1} parent=1 // pred_fallthru
      _
    // Predicated region
    $region38: #{tpu_custom_call.1} parent=1 // pred_check
      _
    $region39: #{tpu_custom_call.1} parent=1 // pred_check_branch
      %77 = sbr.rel (0) target = $region41
    $region40: #{tpu_custom_call.1} parent=1 // pred_region
      %78 = dma.done [#allocation7], 4096
    $region41: #{tpu_custom_call.1} parent=1 // pred_fallthru
      _
    // Predicated region
    $region42: #{tpu_custom_call.1} parent=1 // pred_check
      _
    $region43: #{tpu_custom_call.1} parent=1 // pred_check_branch
      %80 = sbr.rel (0) target = $region45
    $region44: #{tpu_custom_call.1} parent=1 // pred_region
      %81 = dma.done [#allocation10], 1024
    $region45: #{tpu_custom_call.1} parent=1 // pred_fallthru
      _
    %v83 = vld [vmem:[%s2] sm:$0x1]
    %v84 = vld [vmem:[#allocation3] sm:$0xff]
    %v85 = vld [vmem:[#allocation3 + $0x8] sm:$0xff]
    %v86 = vld [vmem:[#allocation3 + $0x10] sm:$0xf]
    %v87 = vld [vmem:[#allocation3 + $0x40] sm:$0xff]
    %v88 = vld [vmem:[#allocation3 + $0x48] sm:$0xff]
    %v89 = vld [vmem:[#allocation3 + $0x50] sm:$0xf]
    %v90 = vld [vmem:[#allocation6] sm:$0xf]
    %v91 = vld [vmem:[#allocation6 + $0x4] sm:$0xf]
    %v92 = vld [vmem:[#allocation6 + $0x8] sm:$0xf]
    %v93 = vld [vmem:[#allocation6 + $0xc] sm:$0xf]
    %v94 = vld [vmem:[#allocation6 + $0x10] sm:$0xf]
    %v95 = vld [vmem:[#allocation6 + $0x14] sm:$0xf]
    %v96 = vld [vmem:[#allocation6 + $0x18] sm:$0xf]
    %v97 = vld [vmem:[#allocation6 + $0x1c] sm:$0xf]
    %v98 = vld [vmem:[#allocation6 + $0x20] sm:$0xf]
    %v99 = vld [vmem:[#allocation6 + $0x24] sm:$0xf]
    %v100 = vld [vmem:[#allocation6 + $0x28] sm:$0xf]
    %v101 = vld [vmem:[#allocation6 + $0x2c] sm:$0xf]
    %v102 = vld [vmem:[#allocation6 + $0x30] sm:$0xf]
    %v103 = vld [vmem:[#allocation6 + $0x34] sm:$0xf]
    %v104 = vld [vmem:[#allocation6 + $0x38] sm:$0xf]
    %v105 = vld [vmem:[#allocation6 + $0x3c] sm:$0xf]
    %v106 = vld [vmem:[#allocation6 + $0x40] sm:$0xf]
    %v107 = vld [vmem:[#allocation6 + $0x44] sm:$0xf]
    %v108 = vld [vmem:[#allocation6 + $0x48] sm:$0xf]
    %v109 = vld [vmem:[#allocation6 + $0x4c] sm:$0xf]
    %v110 = vld [vmem:[#allocation6 + $0x50] sm:$0xf]
    %v111 = vld [vmem:[#allocation6 + $0x54] sm:$0xf]
    %v112 = vld [vmem:[#allocation6 + $0x58] sm:$0xf]
    %v113 = vld [vmem:[#allocation6 + $0x5c] sm:$0xf]
    %v114 = vld [vmem:[#allocation6 + $0x60] sm:$0xf]
    %v115 = vld [vmem:[#allocation6 + $0x64] sm:$0xf]
    %v116 = vld [vmem:[#allocation6 + $0x68] sm:$0xf]
    %v117 = vld [vmem:[#allocation6 + $0x6c] sm:$0xf]
    %v118 = vld [vmem:[#allocation6 + $0x70] sm:$0xf]
    %v119 = vld [vmem:[#allocation6 + $0x74] sm:$0xf]
    %v120 = vld [vmem:[#allocation6 + $0x78] sm:$0xf]
    %v121 = vld [vmem:[#allocation6 + $0x7c] sm:$0xf]
    %v122 = vld [vmem:[#allocation6 + $0x80] sm:$0xf]
    %v123 = vld [vmem:[#allocation6 + $0x84] sm:$0xf]
    %v124 = vld [vmem:[#allocation6 + $0x88] sm:$0xf]
    %v125 = vld [vmem:[#allocation6 + $0x8c] sm:$0xf]
    %v126 = vld [vmem:[#allocation6 + $0x90] sm:$0xf]
    %v127 = vld [vmem:[#allocation6 + $0x94] sm:$0xf]
    %v128 = vld [vmem:[#allocation6 + $0x98] sm:$0xf]
    %v129 = vld [vmem:[#allocation6 + $0x9c] sm:$0xf]
    %v130 = vld [vmem:[#allocation6 + $0xa0] sm:$0xf]
    %v131 = vld [vmem:[#allocation6 + $0xa4] sm:$0xf]
    %v132 = vld [vmem:[#allocation6 + $0xa8] sm:$0xf]
    %v133 = vld [vmem:[#allocation6 + $0xac] sm:$0xf]
    %v134 = vld [vmem:[#allocation6 + $0xb0] sm:$0xf]
    %v135 = vld [vmem:[#allocation6 + $0xb4] sm:$0xf]
    %v136 = vld [vmem:[#allocation6 + $0xb8] sm:$0xf]
    %v137 = vld [vmem:[#allocation6 + $0xbc] sm:$0xf]
    %v138 = vld [vmem:[#allocation6 + $0xc0] sm:$0xf]
    %v139 = vld [vmem:[#allocation6 + $0xc4] sm:$0xf]
    %v140 = vld [vmem:[#allocation6 + $0xc8] sm:$0xf]
    %v141 = vld [vmem:[#allocation6 + $0xcc] sm:$0xf]
    %v142 = vld [vmem:[#allocation6 + $0xd0] sm:$0xf]
    %v143 = vld [vmem:[#allocation6 + $0xd4] sm:$0xf]
    %v144 = vld [vmem:[#allocation6 + $0xd8] sm:$0xf]
    %v145 = vld [vmem:[#allocation6 + $0xdc] sm:$0xf]
    %v146 = vld [vmem:[#allocation6 + $0xe0] sm:$0xf]
    %v147 = vld [vmem:[#allocation6 + $0xe4] sm:$0xf]
    %v148 = vld [vmem:[#allocation6 + $0xe8] sm:$0xf]
    %v149 = vld [vmem:[#allocation6 + $0xec] sm:$0xf]
    %v150 = vld [vmem:[#allocation6 + $0xf0] sm:$0xf]
    %v151 = vld [vmem:[#allocation6 + $0xf4] sm:$0xf]
    %v152 = vld [vmem:[#allocation6 + $0xf8] sm:$0xf]
    %v153 = vld [vmem:[#allocation6 + $0xfc] sm:$0xf]
    %v154 = vld [vmem:[#allocation6 + $0x100] sm:$0xf]
    %v155 = vld [vmem:[#allocation6 + $0x104] sm:$0xf]
    %v156 = vld [vmem:[#allocation6 + $0x108] sm:$0xf]
    %v157 = vld [vmem:[#allocation6 + $0x10c] sm:$0xf]
    %v158 = vld [vmem:[#allocation6 + $0x110] sm:$0xf]
    %v159 = vld [vmem:[#allocation6 + $0x114] sm:$0xf]
    %v160 = vld [vmem:[#allocation6 + $0x118] sm:$0xf]
    %v161 = vld [vmem:[#allocation6 + $0x11c] sm:$0xf]
    %v162 = vld [vmem:[#allocation6 + $0x120] sm:$0xf]
    %v163 = vld [vmem:[#allocation6 + $0x124] sm:$0xf]
    %v164 = vld [vmem:[#allocation6 + $0x128] sm:$0xf]
    %v165 = vld [vmem:[#allocation6 + $0x12c] sm:$0xf]
    %v166 = vld [vmem:[#allocation6 + $0x130] sm:$0xf]
    %v167 = vld [vmem:[#allocation6 + $0x134] sm:$0xf]
    %v168 = vld [vmem:[#allocation6 + $0x138] sm:$0xf]
    %v169 = vld [vmem:[#allocation6 + $0x13c] sm:$0xf]
    %v171 = vlaneseq
    %v172 = vshrl.u32 %v171, 7
    %v173 = vsub.s32 0, %v172
    %v174 = vrot.slane %v83, %v173
    %v182 = vunpack.c.l.b16 %v84
    %v183 = vunpack.c.h.b16 %v84
    %v184 = vunpack.c.l.b16 %v85
    %v185 = vunpack.c.h.b16 %v85
    %v186 = vunpack.c.l.b16 %v86
    %v187 = vunpack.c.l.b16 %v87
    %v188 = vunpack.c.h.b16 %v87
    %v189 = vunpack.c.l.b16 %v88
    %v190 = vunpack.c.h.b16 %v88
    %v191 = vunpack.c.l.b16 %v89
    %v192 = vpack.c.b16 %v187, %v182
    %v193 = vpack.c.b16 %v188, %v183
    %v194 = vpack.c.b16 %v189, %v184
    %v195 = vpack.c.b16 %v190, %v185
    %v196 = vpack.c.b16 %v191, %v186
    %v282 = vunpack.c.l.b16 %v90
    %v283 = vunpack.c.l.b16 %v91
    %v284 = vunpack.c.l.b16 %v92
    %v285 = vunpack.c.l.b16 %v93
    %v286 = vunpack.c.l.b16 %v94
    %v287 = vunpack.c.l.b16 %v95
    %v288 = vunpack.c.l.b16 %v96
    %v289 = vunpack.c.l.b16 %v97
    %v290 = vunpack.c.l.b16 %v98
    %v291 = vunpack.c.l.b16 %v99
    %v292 = vunpack.c.l.b16 %v100
    %v293 = vunpack.c.l.b16 %v101
    %v294 = vunpack.c.l.b16 %v102
    %v295 = vunpack.c.l.b16 %v103
    %v296 = vunpack.c.l.b16 %v104
    %v297 = vunpack.c.l.b16 %v105
    %v298 = vunpack.c.l.b16 %v106
    %v299 = vunpack.c.l.b16 %v107
    %v300 = vunpack.c.l.b16 %v108
    %v301 = vunpack.c.l.b16 %v109
    %v302 = vunpack.c.l.b16 %v110
    %v303 = vunpack.c.l.b16 %v111
    %v304 = vunpack.c.l.b16 %v112
    %v305 = vunpack.c.l.b16 %v113
    %v306 = vunpack.c.l.b16 %v114
    %v307 = vunpack.c.l.b16 %v115
    %v308 = vunpack.c.l.b16 %v116
    %v309 = vunpack.c.l.b16 %v117
    %v310 = vunpack.c.l.b16 %v118
    %v311 = vunpack.c.l.b16 %v119
    %v312 = vunpack.c.l.b16 %v120
    %v313 = vunpack.c.l.b16 %v121
    %v314 = vunpack.c.l.b16 %v122
    %v315 = vunpack.c.l.b16 %v123
    %v316 = vunpack.c.l.b16 %v124
    %v317 = vunpack.c.l.b16 %v125
    %v318 = vunpack.c.l.b16 %v126
    %v319 = vunpack.c.l.b16 %v127
    %v320 = vunpack.c.l.b16 %v128
    %v321 = vunpack.c.l.b16 %v129
    %v322 = vunpack.c.l.b16 %v130
    %v323 = vunpack.c.l.b16 %v131
    %v324 = vunpack.c.l.b16 %v132
    %v325 = vunpack.c.l.b16 %v133
    %v326 = vunpack.c.l.b16 %v134
    %v327 = vunpack.c.l.b16 %v135
    %v328 = vunpack.c.l.b16 %v136
    %v329 = vunpack.c.l.b16 %v137
    %v330 = vunpack.c.l.b16 %v138
    %v331 = vunpack.c.l.b16 %v139
    %v332 = vunpack.c.l.b16 %v140
    %v333 = vunpack.c.l.b16 %v141
    %v334 = vunpack.c.l.b16 %v142
    %v335 = vunpack.c.l.b16 %v143
    %v336 = vunpack.c.l.b16 %v144
    %v337 = vunpack.c.l.b16 %v145
    %v338 = vunpack.c.l.b16 %v146
    %v339 = vunpack.c.l.b16 %v147
    %v340 = vunpack.c.l.b16 %v148
    %v341 = vunpack.c.l.b16 %v149
    %v342 = vunpack.c.l.b16 %v150
    %v343 = vunpack.c.l.b16 %v151
    %v344 = vunpack.c.l.b16 %v152
    %v345 = vunpack.c.l.b16 %v153
    %v346 = vunpack.c.l.b16 %v154
    %v347 = vunpack.c.l.b16 %v155
    %v348 = vunpack.c.l.b16 %v156
    %v349 = vunpack.c.l.b16 %v157
    %v350 = vunpack.c.l.b16 %v158
    %v351 = vunpack.c.l.b16 %v159
    %v352 = vunpack.c.l.b16 %v160
    %v353 = vunpack.c.l.b16 %v161
    %v354 = vunpack.c.l.b16 %v162
    %v355 = vunpack.c.l.b16 %v163
    %v356 = vunpack.c.l.b16 %v164
    %v357 = vunpack.c.l.b16 %v165
    %v358 = vunpack.c.l.b16 %v166
    %v359 = vunpack.c.l.b16 %v167
    %v360 = vunpack.c.l.b16 %v168
    %v361 = vunpack.c.l.b16 %v169
    %v362 = vpack.c.b16 %v283, %v282
    %v363 = vpack.c.b16 %v285, %v284
    %v364 = vpack.c.b16 %v287, %v286
    %v365 = vpack.c.b16 %v289, %v288
    %v366 = vpack.c.b16 %v291, %v290
    %v367 = vpack.c.b16 %v293, %v292
    %v368 = vpack.c.b16 %v295, %v294
    %v369 = vpack.c.b16 %v297, %v296
    %v370 = vpack.c.b16 %v299, %v298
    %v371 = vpack.c.b16 %v301, %v300
    %v372 = vpack.c.b16 %v303, %v302
    %v373 = vpack.c.b16 %v305, %v304
    %v374 = vpack.c.b16 %v307, %v306
    %v375 = vpack.c.b16 %v309, %v308
    %v376 = vpack.c.b16 %v311, %v310
    %v377 = vpack.c.b16 %v313, %v312
    %v378 = vpack.c.b16 %v315, %v314
    %v379 = vpack.c.b16 %v317, %v316
    %v380 = vpack.c.b16 %v319, %v318
    %v381 = vpack.c.b16 %v321, %v320
    %v382 = vpack.c.b16 %v323, %v322
    %v383 = vpack.c.b16 %v325, %v324
    %v384 = vpack.c.b16 %v327, %v326
    %v385 = vpack.c.b16 %v329, %v328
    %v386 = vpack.c.b16 %v331, %v330
    %v387 = vpack.c.b16 %v333, %v332
    %v388 = vpack.c.b16 %v335, %v334
    %v389 = vpack.c.b16 %v337, %v336
    %v390 = vpack.c.b16 %v339, %v338
    %v391 = vpack.c.b16 %v341, %v340
    %v392 = vpack.c.b16 %v343, %v342
    %v393 = vpack.c.b16 %v345, %v344
    %v394 = vpack.c.b16 %v347, %v346
    %v395 = vpack.c.b16 %v349, %v348
    %v396 = vpack.c.b16 %v351, %v350
    %v397 = vpack.c.b16 %v353, %v352
    %v398 = vpack.c.b16 %v355, %v354
    %v399 = vpack.c.b16 %v357, %v356
    %v400 = vpack.c.b16 %v359, %v358
    %v401 = vpack.c.b16 %v361, %v360
    %442 = vmatprep.subr.bf16.mxu0 0
    %443 = vmatpush1.bf16.msra.mxu0 %v362
    %444 = vmatprep.subr.bf16.mxu0 0
    %445 = vmatpush1.bf16.msra.mxu0 %v363
    %446 = vmatprep.subr.bf16.mxu0 0
    %447 = vmatpush1.bf16.msra.mxu0 %v364
    %448 = vmatprep.subr.bf16.mxu0 0
    %449 = vmatpush1.bf16.msra.mxu0 %v365
    %450 = vmatprep.subr.bf16.mxu0 0
    %451 = vmatpush1.bf16.msra.mxu0 %v366
    %452 = vmatprep.subr.bf16.mxu0 0
    %453 = vmatpush1.bf16.msra.mxu0 %v367
    %454 = vmatprep.subr.bf16.mxu0 0
    %455 = vmatpush1.bf16.msra.mxu0 %v368
    %456 = vmatprep.subr.bf16.mxu0 0
    %457 = vmatpush1.bf16.msra.mxu0 %v369
    %458 = vmatprep.subr.bf16.mxu0 0
    %459 = vmatpush1.bf16.msra.mxu0 %v370
    %460 = vmatprep.subr.bf16.mxu0 0
    %461 = vmatpush1.bf16.msra.mxu0 %v371
    %462 = vmatprep.subr.bf16.mxu0 0
    %463 = vmatpush1.bf16.msra.mxu0 %v372
    %464 = vmatprep.subr.bf16.mxu0 0
    %465 = vmatpush1.bf16.msra.mxu0 %v373
    %466 = vmatprep.subr.bf16.mxu0 0
    %467 = vmatpush1.bf16.msra.mxu0 %v374
    %468 = vmatprep.subr.bf16.mxu0 0
    %469 = vmatpush1.bf16.msra.mxu0 %v375
    %470 = vmatprep.subr.bf16.mxu0 0
    %471 = vmatpush1.bf16.msra.mxu0 %v376
    %472 = vmatprep.subr.bf16.mxu0 0
    %473 = vmatpush1.bf16.msra.mxu0 %v377
    %474 = vmatprep.mubr.bf16.mxu0 %v193
    %475 = vmatmul.mubr.bf16.gmra.mrb[0].mxu0 %v192
    %v476 = vpop.f32.mrb[0].mxu0
    %v477 = vadd.f32 %v174, %v476
    %v478 = vpop.f32.mrb[0].mxu0
    %v479 = vpop.f32.mrb[0].mxu0
    %v480 = vadd.f32 %v174, %v479
    %v481 = vpop.f32.mrb[0].mxu0
    %482 = vdwg.mxu0
    %483 = vmatprep.subr.bf16.mxu0 0
    %484 = vmatpush1.bf16.msra.mxu0 %v378
    %485 = vmatprep.subr.bf16.mxu0 0
    %486 = vmatpush1.bf16.msra.mxu0 %v379
    %487 = vmatprep.subr.bf16.mxu0 0
    %488 = vmatpush1.bf16.msra.mxu0 %v380
    %489 = vmatprep.subr.bf16.mxu0 0
    %490 = vmatpush1.bf16.msra.mxu0 %v381
    %491 = vmatprep.subr.bf16.mxu0 0
    %492 = vmatpush1.bf16.msra.mxu0 %v382
    %493 = vmatprep.subr.bf16.mxu0 0
    %494 = vmatpush1.bf16.msra.mxu0 %v383
    %495 = vmatprep.subr.bf16.mxu0 0
    %496 = vmatpush1.bf16.msra.mxu0 %v384
    %497 = vmatprep.subr.bf16.mxu0 0
    %498 = vmatpush1.bf16.msra.mxu0 %v385
    %499 = vmatprep.subr.bf16.mxu0 0
    %500 = vmatpush1.bf16.msra.mxu0 %v386
    %501 = vmatprep.subr.bf16.mxu0 0
    %502 = vmatpush1.bf16.msra.mxu0 %v387
    %503 = vmatprep.subr.bf16.mxu0 0
    %504 = vmatpush1.bf16.msra.mxu0 %v388
    %505 = vmatprep.subr.bf16.mxu0 0
    %506 = vmatpush1.bf16.msra.mxu0 %v389
    %507 = vmatprep.subr.bf16.mxu0 0
    %508 = vmatpush1.bf16.msra.mxu0 %v390
    %509 = vmatprep.subr.bf16.mxu0 0
    %510 = vmatpush1.bf16.msra.mxu0 %v391
    %511 = vmatprep.subr.bf16.mxu0 0
    %512 = vmatpush1.bf16.msra.mxu0 %v392
    %513 = vmatprep.subr.bf16.mxu0 0
    %514 = vmatpush1.bf16.msra.mxu0 %v393
    %515 = vmatprep.mubr.bf16.mxu0 %v195
    %516 = vmatmul.mubr.bf16.gmra.mrb[0].mxu0 %v194
    %v517 = vpop.f32.mrb[0].mxu0
    %v518 = vadd.f32 %v477, %v517
    %v519 = vpop.f32.mrb[0].mxu0
    %v520 = vpop.f32.mrb[0].mxu0
    %v521 = vadd.f32 %v480, %v520
    %v522 = vpop.f32.mrb[0].mxu0
    %523 = vdwg.mxu0
    %524 = vmatprep.subr.bf16.mxu0 0
    %525 = vmatpush1.bf16.msra.mxu0 %v394
    %526 = vmatprep.subr.bf16.mxu0 0
    %527 = vmatpush1.bf16.msra.mxu0 %v395
    %528 = vmatprep.subr.bf16.mxu0 0
    %529 = vmatpush1.bf16.msra.mxu0 %v396
    %530 = vmatprep.subr.bf16.mxu0 0
    %531 = vmatpush1.bf16.msra.mxu0 %v397
    %532 = vmatprep.subr.bf16.mxu0 0
    %533 = vmatpush1.bf16.msra.mxu0 %v398
    %534 = vmatprep.subr.bf16.mxu0 0
    %535 = vmatpush1.bf16.msra.mxu0 %v399
    %536 = vmatprep.subr.bf16.mxu0 0
    %537 = vmatpush1.bf16.msra.mxu0 %v400
    %538 = vmatprep.subr.bf16.mxu0 0
    %539 = vmatpush1.bf16.msra.mxu0 %v401
    %540 = vmatprep.subr.bf16.mxu0 0
    %541 = vmatpush1.bf16.msra.mxu0 0
    %542 = vmatprep.subr.bf16.mxu0 0
    %543 = vmatpush1.bf16.msra.mxu0 0
    %544 = vmatprep.subr.bf16.mxu0 0
    %545 = vmatpush1.bf16.msra.mxu0 0
    %546 = vmatprep.subr.bf16.mxu0 0
    %547 = vmatpush1.bf16.msra.mxu0 0
    %548 = vmatprep.subr.bf16.mxu0 0
    %549 = vmatpush1.bf16.msra.mxu0 0
    %550 = vmatprep.subr.bf16.mxu0 0
    %551 = vmatpush1.bf16.msra.mxu0 0
    %552 = vmatprep.subr.bf16.mxu0 0
    %553 = vmatpush1.bf16.msra.mxu0 0
    %554 = vmatprep.subr.bf16.mxu0 0
    %555 = vmatpush1.bf16.msra.mxu0 0
    %556 = vmatprep.mubr.bf16.mxu0 0
    %557 = vmatmul.mubr.bf16.gmra.mrb[0].mxu0 %v196
    %v558 = vpop.f32.mrb[0].mxu0
    %v559 = vadd.f32 %v518, %v558
    %v560 = vpop.f32.mrb[0].mxu0
    %v561 = vpop.f32.mrb[0].mxu0
    %v562 = vadd.f32 %v521, %v561
    %v563 = vpop.f32.mrb[0].mxu0
    %564 = vdwg.mxu0
    %v565 = vtanh.pop %v559
    %v566 = vtanh.pop %v562
    %v567 = vpack.c.bf16 %v566, %v565
    %568 = vst [vmem:[#allocation2] sm:$0xff] %v567
    %v569 = vld [vmem:[#allocation3 + $0xc] sm:$0xff]
    %v570 = vld [vmem:[#allocation3 + $0x14] sm:$0xff]
    %v571 = vld [vmem:[#allocation3 + $0x1c] sm:$0xf]
    %v572 = vld [vmem:[#allocation3 + $0x4c] sm:$0xff]
    %v573 = vld [vmem:[#allocation3 + $0x54] sm:$0xff]
    %v574 = vld [vmem:[#allocation3 + $0x5c] sm:$0xf]
    %v575 = vld [vmem:[#allocation6] sm:$0xf]
    %v576 = vld [vmem:[#allocation6 + $0x4] sm:$0xf]
    %v577 = vld [vmem:[#allocation6 + $0x8] sm:$0xf]
    %v578 = vld [vmem:[#allocation6 + $0xc] sm:$0xf]
    %v579 = vld [vmem:[#allocation6 + $0x10] sm:$0xf]
    %v580 = vld [vmem:[#allocation6 + $0x14] sm:$0xf]
    %v581 = vld [vmem:[#allocation6 + $0x18] sm:$0xf]
    %v582 = vld [vmem:[#allocation6 + $0x1c] sm:$0xf]
    %v583 = vld [vmem:[#allocation6 + $0x20] sm:$0xf]
    %v584 = vld [vmem:[#allocation6 + $0x24] sm:$0xf]
    %v585 = vld [vmem:[#allocation6 + $0x28] sm:$0xf]
    %v586 = vld [vmem:[#allocation6 + $0x2c] sm:$0xf]
    %v587 = vld [vmem:[#allocation6 + $0x30] sm:$0xf]
    %v588 = vld [vmem:[#allocation6 + $0x34] sm:$0xf]
    %v589 = vld [vmem:[#allocation6 + $0x38] sm:$0xf]
    %v590 = vld [vmem:[#allocation6 + $0x3c] sm:$0xf]
    %v591 = vld [vmem:[#allocation6 + $0x40] sm:$0xf]
    %v592 = vld [vmem:[#allocation6 + $0x44] sm:$0xf]
    %v593 = vld [vmem:[#allocation6 + $0x48] sm:$0xf]
    %v594 = vld [vmem:[#allocation6 + $0x4c] sm:$0xf]
    %v595 = vld [vmem:[#allocation6 + $0x50] sm:$0xf]
    %v596 = vld [vmem:[#allocation6 + $0x54] sm:$0xf]
    %v597 = vld [vmem:[#allocation6 + $0x58] sm:$0xf]
    %v598 = vld [vmem:[#allocation6 + $0x5c] sm:$0xf]
    %v599 = vld [vmem:[#allocation6 + $0x60] sm:$0xf]
    %v600 = vld [vmem:[#allocation6 + $0x64] sm:$0xf]
    %v601 = vld [vmem:[#allocation6 + $0x68] sm:$0xf]
    %v602 = vld [vmem:[#allocation6 + $0x6c] sm:$0xf]
    %v603 = vld [vmem:[#allocation6 + $0x70] sm:$0xf]
    %v604 = vld [vmem:[#allocation6 + $0x74] sm:$0xf]
    %v605 = vld [vmem:[#allocation6 + $0x78] sm:$0xf]
    %v606 = vld [vmem:[#allocation6 + $0x7c] sm:$0xf]
    %v607 = vld [vmem:[#allocation6 + $0x80] sm:$0xf]
    %v608 = vld [vmem:[#allocation6 + $0x84] sm:$0xf]
    %v609 = vld [vmem:[#allocation6 + $0x88] sm:$0xf]
    %v610 = vld [vmem:[#allocation6 + $0x8c] sm:$0xf]
    %v611 = vld [vmem:[#allocation6 + $0x90] sm:$0xf]
    %v612 = vld [vmem:[#allocation6 + $0x94] sm:$0xf]
    %v613 = vld [vmem:[#allocation6 + $0x98] sm:$0xf]
    %v614 = vld [vmem:[#allocation6 + $0x9c] sm:$0xf]
    %v615 = vld [vmem:[#allocation6 + $0xa0] sm:$0xf]
    %v616 = vld [vmem:[#allocation6 + $0xa4] sm:$0xf]
    %v617 = vld [vmem:[#allocation6 + $0xa8] sm:$0xf]
    %v618 = vld [vmem:[#allocation6 + $0xac] sm:$0xf]
    %v619 = vld [vmem:[#allocation6 + $0xb0] sm:$0xf]
    %v620 = vld [vmem:[#allocation6 + $0xb4] sm:$0xf]
    %v621 = vld [vmem:[#allocation6 + $0xb8] sm:$0xf]
    %v622 = vld [vmem:[#allocation6 + $0xbc] sm:$0xf]
    %v623 = vld [vmem:[#allocation6 + $0xc0] sm:$0xf]
    %v624 = vld [vmem:[#allocation6 + $0xc4] sm:$0xf]
    %v625 = vld [vmem:[#allocation6 + $0xc8] sm:$0xf]
    %v626 = vld [vmem:[#allocation6 + $0xcc] sm:$0xf]
    %v627 = vld [vmem:[#allocation6 + $0xd0] sm:$0xf]
    %v628 = vld [vmem:[#allocation6 + $0xd4] sm:$0xf]
    %v629 = vld [vmem:[#allocation6 + $0xd8] sm:$0xf]
    %v630 = vld [vmem:[#allocation6 + $0xdc] sm:$0xf]
    %v631 = vld [vmem:[#allocation6 + $0xe0] sm:$0xf]
    %v632 = vld [vmem:[#allocation6 + $0xe4] sm:$0xf]
    %v633 = vld [vmem:[#allocation6 + $0xe8] sm:$0xf]
    %v634 = vld [vmem:[#allocation6 + $0xec] sm:$0xf]
    %v635 = vld [vmem:[#allocation6 + $0xf0] sm:$0xf]
    %v636 = vld [vmem:[#allocation6 + $0xf4] sm:$0xf]
    %v637 = vld [vmem:[#allocation6 + $0xf8] sm:$0xf]
    %v638 = vld [vmem:[#allocation6 + $0xfc] sm:$0xf]
    %v639 = vld [vmem:[#allocation6 + $0x100] sm:$0xf]
    %v640 = vld [vmem:[#allocation6 + $0x104] sm:$0xf]
    %v641 = vld [vmem:[#allocation6 + $0x108] sm:$0xf]
    %v642 = vld [vmem:[#allocation6 + $0x10c] sm:$0xf]
    %v643 = vld [vmem:[#allocation6 + $0x110] sm:$0xf]
    %v644 = vld [vmem:[#allocation6 + $0x114] sm:$0xf]
    %v645 = vld [vmem:[#allocation6 + $0x118] sm:$0xf]
    %v646 = vld [vmem:[#allocation6 + $0x11c] sm:$0xf]
    %v647 = vld [vmem:[#allocation6 + $0x120] sm:$0xf]
    %v648 = vld [vmem:[#allocation6 + $0x124] sm:$0xf]
    %v649 = vld [vmem:[#allocation6 + $0x128] sm:$0xf]
    %v650 = vld [vmem:[#allocation6 + $0x12c] sm:$0xf]
    %v651 = vld [vmem:[#allocation6 + $0x130] sm:$0xf]
    %v652 = vld [vmem:[#allocation6 + $0x134] sm:$0xf]
    %v653 = vld [vmem:[#allocation6 + $0x138] sm:$0xf]
    %v654 = vld [vmem:[#allocation6 + $0x13c] sm:$0xf]
    %v661 = vunpack.c.l.b16 %v569
    %v662 = vunpack.c.h.b16 %v569
    %v663 = vunpack.c.l.b16 %v570
    %v664 = vunpack.c.h.b16 %v570
    %v665 = vunpack.c.l.b16 %v571
    %v666 = vunpack.c.l.b16 %v572
    %v667 = vunpack.c.h.b16 %v572
    %v668 = vunpack.c.l.b16 %v573
    %v669 = vunpack.c.h.b16 %v573
    %v670 = vunpack.c.l.b16 %v574
    %v671 = vpack.c.b16 %v666, %v661
    %v672 = vpack.c.b16 %v667, %v662
    %v673 = vpack.c.b16 %v668, %v663
    %v674 = vpack.c.b16 %v669, %v664
    %v675 = vpack.c.b16 %v670, %v665
    %v761 = vunpack.c.l.b16 %v575
    %v762 = vunpack.c.l.b16 %v576
    %v763 = vunpack.c.l.b16 %v577
    %v764 = vunpack.c.l.b16 %v578
    %v765 = vunpack.c.l.b16 %v579
    %v766 = vunpack.c.l.b16 %v580
    %v767 = vunpack.c.l.b16 %v581
    %v768 = vunpack.c.l.b16 %v582
    %v769 = vunpack.c.l.b16 %v583
    %v770 = vunpack.c.l.b16 %v584
    %v771 = vunpack.c.l.b16 %v585
    %v772 = vunpack.c.l.b16 %v586
    %v773 = vunpack.c.l.b16 %v587
    %v774 = vunpack.c.l.b16 %v588
    %v775 = vunpack.c.l.b16 %v589
    %v776 = vunpack.c.l.b16 %v590
    %v777 = vunpack.c.l.b16 %v591
    %v778 = vunpack.c.l.b16 %v592
    %v779 = vunpack.c.l.b16 %v593
    %v780 = vunpack.c.l.b16 %v594
    %v781 = vunpack.c.l.b16 %v595
    %v782 = vunpack.c.l.b16 %v596
    %v783 = vunpack.c.l.b16 %v597
    %v784 = vunpack.c.l.b16 %v598
    %v785 = vunpack.c.l.b16 %v599
    %v786 = vunpack.c.l.b16 %v600
    %v787 = vunpack.c.l.b16 %v601
    %v788 = vunpack.c.l.b16 %v602
    %v789 = vunpack.c.l.b16 %v603
    %v790 = vunpack.c.l.b16 %v604
    %v791 = vunpack.c.l.b16 %v605
    %v792 = vunpack.c.l.b16 %v606
    %v793 = vunpack.c.l.b16 %v607
    %v794 = vunpack.c.l.b16 %v608
    %v795 = vunpack.c.l.b16 %v609
    %v796 = vunpack.c.l.b16 %v610
    %v797 = vunpack.c.l.b16 %v611
    %v798 = vunpack.c.l.b16 %v612
    %v799 = vunpack.c.l.b16 %v613
    %v800 = vunpack.c.l.b16 %v614
    %v801 = vunpack.c.l.b16 %v615
    %v802 = vunpack.c.l.b16 %v616
    %v803 = vunpack.c.l.b16 %v617
    %v804 = vunpack.c.l.b16 %v618
    %v805 = vunpack.c.l.b16 %v619
    %v806 = vunpack.c.l.b16 %v620
    %v807 = vunpack.c.l.b16 %v621
    %v808 = vunpack.c.l.b16 %v622
    %v809 = vunpack.c.l.b16 %v623
    %v810 = vunpack.c.l.b16 %v624
    %v811 = vunpack.c.l.b16 %v625
    %v812 = vunpack.c.l.b16 %v626
    %v813 = vunpack.c.l.b16 %v627
    %v814 = vunpack.c.l.b16 %v628
    %v815 = vunpack.c.l.b16 %v629
    %v816 = vunpack.c.l.b16 %v630
    %v817 = vunpack.c.l.b16 %v631
    %v818 = vunpack.c.l.b16 %v632
    %v819 = vunpack.c.l.b16 %v633
    %v820 = vunpack.c.l.b16 %v634
    %v821 = vunpack.c.l.b16 %v635
    %v822 = vunpack.c.l.b16 %v636
    %v823 = vunpack.c.l.b16 %v637
    %v824 = vunpack.c.l.b16 %v638
    %v825 = vunpack.c.l.b16 %v639
    %v826 = vunpack.c.l.b16 %v640
    %v827 = vunpack.c.l.b16 %v641
    %v828 = vunpack.c.l.b16 %v642
    %v829 = vunpack.c.l.b16 %v643
    %v830 = vunpack.c.l.b16 %v644
    %v831 = vunpack.c.l.b16 %v645
    %v832 = vunpack.c.l.b16 %v646
    %v833 = vunpack.c.l.b16 %v647
    %v834 = vunpack.c.l.b16 %v648
    %v835 = vunpack.c.l.b16 %v649
    %v836 = vunpack.c.l.b16 %v650
    %v837 = vunpack.c.l.b16 %v651
    %v838 = vunpack.c.l.b16 %v652
    %v839 = vunpack.c.l.b16 %v653
    %v840 = vunpack.c.l.b16 %v654
    %v841 = vpack.c.b16 %v762, %v761
    %v842 = vpack.c.b16 %v764, %v763
    %v843 = vpack.c.b16 %v766, %v765
    %v844 = vpack.c.b16 %v768, %v767
    %v845 = vpack.c.b16 %v770, %v769
    %v846 = vpack.c.b16 %v772, %v771
    %v847 = vpack.c.b16 %v774, %v773
    %v848 = vpack.c.b16 %v776, %v775
    %v849 = vpack.c.b16 %v778, %v777
    %v850 = vpack.c.b16 %v780, %v779
    %v851 = vpack.c.b16 %v782, %v781
    %v852 = vpack.c.b16 %v784, %v783
    %v853 = vpack.c.b16 %v786, %v785
    %v854 = vpack.c.b16 %v788, %v787
    %v855 = vpack.c.b16 %v790, %v789
    %v856 = vpack.c.b16 %v792, %v791
    %v857 = vpack.c.b16 %v794, %v793
    %v858 = vpack.c.b16 %v796, %v795
    %v859 = vpack.c.b16 %v798, %v797
    %v860 = vpack.c.b16 %v800, %v799
    %v861 = vpack.c.b16 %v802, %v801
    %v862 = vpack.c.b16 %v804, %v803
    %v863 = vpack.c.b16 %v806, %v805
    %v864 = vpack.c.b16 %v808, %v807
    %v865 = vpack.c.b16 %v810, %v809
    %v866 = vpack.c.b16 %v812, %v811
    %v867 = vpack.c.b16 %v814, %v813
    %v868 = vpack.c.b16 %v816, %v815
    %v869 = vpack.c.b16 %v818, %v817
    %v870 = vpack.c.b16 %v820, %v819
    %v871 = vpack.c.b16 %v822, %v821
    %v872 = vpack.c.b16 %v824, %v823
    %v873 = vpack.c.b16 %v826, %v825
    %v874 = vpack.c.b16 %v828, %v827
    %v875 = vpack.c.b16 %v830, %v829
    %v876 = vpack.c.b16 %v832, %v831
    %v877 = vpack.c.b16 %v834, %v833
    %v878 = vpack.c.b16 %v836, %v835
    %v879 = vpack.c.b16 %v838, %v837
    %v880 = vpack.c.b16 %v840, %v839
    %921 = vmatprep.subr.bf16.mxu0 0
    %922 = vmatpush1.bf16.msra.mxu0 %v841
    %923 = vmatprep.subr.bf16.mxu0 0
    %924 = vmatpush1.bf16.msra.mxu0 %v842
    %925 = vmatprep.subr.bf16.mxu0 0
    %926 = vmatpush1.bf16.msra.mxu0 %v843
    %927 = vmatprep.subr.bf16.mxu0 0
    %928 = vmatpush1.bf16.msra.mxu0 %v844
    %929 = vmatprep.subr.bf16.mxu0 0
    %930 = vmatpush1.bf16.msra.mxu0 %v845
    %931 = vmatprep.subr.bf16.mxu0 0
    %932 = vmatpush1.bf16.msra.mxu0 %v846
    %933 = vmatprep.subr.bf16.mxu0 0
    %934 = vmatpush1.bf16.msra.mxu0 %v847
    %935 = vmatprep.subr.bf16.mxu0 0
    %936 = vmatpush1.bf16.msra.mxu0 %v848
    %937 = vmatprep.subr.bf16.mxu0 0
    %938 = vmatpush1.bf16.msra.mxu0 %v849
    %939 = vmatprep.subr.bf16.mxu0 0
    %940 = vmatpush1.bf16.msra.mxu0 %v850
    %941 = vmatprep.subr.bf16.mxu0 0
    %942 = vmatpush1.bf16.msra.mxu0 %v851
    %943 = vmatprep.subr.bf16.mxu0 0
    %944 = vmatpush1.bf16.msra.mxu0 %v852
    %945 = vmatprep.subr.bf16.mxu0 0
    %946 = vmatpush1.bf16.msra.mxu0 %v853
    %947 = vmatprep.subr.bf16.mxu0 0
    %948 = vmatpush1.bf16.msra.mxu0 %v854
    %949 = vmatprep.subr.bf16.mxu0 0
    %950 = vmatpush1.bf16.msra.mxu0 %v855
    %951 = vmatprep.subr.bf16.mxu0 0
    %952 = vmatpush1.bf16.msra.mxu0 %v856
    %953 = vmatprep.mubr.bf16.mxu0 %v672
    %954 = vmatmul.mubr.bf16.gmra.mrb[0].mxu0 %v671
    %v955 = vpop.f32.mrb[0].mxu0
    %v956 = vadd.f32 %v174, %v955
    %v957 = vpop.f32.mrb[0].mxu0
    %v958 = vpop.f32.mrb[0].mxu0
    %v959 = vadd.f32 %v174, %v958
    %v960 = vpop.f32.mrb[0].mxu0
    %961 = vdwg.mxu0
    %962 = vmatprep.subr.bf16.mxu0 0
    %963 = vmatpush1.bf16.msra.mxu0 %v857
    %964 = vmatprep.subr.bf16.mxu0 0
    %965 = vmatpush1.bf16.msra.mxu0 %v858
    %966 = vmatprep.subr.bf16.mxu0 0
    %967 = vmatpush1.bf16.msra.mxu0 %v859
    %968 = vmatprep.subr.bf16.mxu0 0
    %969 = vmatpush1.bf16.msra.mxu0 %v860
    %970 = vmatprep.subr.bf16.mxu0 0
    %971 = vmatpush1.bf16.msra.mxu0 %v861
    %972 = vmatprep.subr.bf16.mxu0 0
    %973 = vmatpush1.bf16.msra.mxu0 %v862
    %974 = vmatprep.subr.bf16.mxu0 0
    %975 = vmatpush1.bf16.msra.mxu0 %v863
    %976 = vmatprep.subr.bf16.mxu0 0
    %977 = vmatpush1.bf16.msra.mxu0 %v864
    %978 = vmatprep.subr.bf16.mxu0 0
    %979 = vmatpush1.bf16.msra.mxu0 %v865
    %980 = vmatprep.subr.bf16.mxu0 0
    %981 = vmatpush1.bf16.msra.mxu0 %v866
    %982 = vmatprep.subr.bf16.mxu0 0
    %983 = vmatpush1.bf16.msra.mxu0 %v867
    %984 = vmatprep.subr.bf16.mxu0 0
    %985 = vmatpush1.bf16.msra.mxu0 %v868
    %986 = vmatprep.subr.bf16.mxu0 0
    %987 = vmatpush1.bf16.msra.mxu0 %v869
    %988 = vmatprep.subr.bf16.mxu0 0
    %989 = vmatpush1.bf16.msra.mxu0 %v870
    %990 = vmatprep.subr.bf16.mxu0 0
    %991 = vmatpush1.bf16.msra.mxu0 %v871
    %992 = vmatprep.subr.bf16.mxu0 0
    %993 = vmatpush1.bf16.msra.mxu0 %v872
    %994 = vmatprep.mubr.bf16.mxu0 %v674
    %995 = vmatmul.mubr.bf16.gmra.mrb[0].mxu0 %v673
    %v996 = vpop.f32.mrb[0].mxu0
    %v997 = vadd.f32 %v956, %v996
    %v998 = vpop.f32.mrb[0].mxu0
    %v999 = vpop.f32.mrb[0].mxu0
    %v1000 = vadd.f32 %v959, %v999
    %v1001 = vpop.f32.mrb[0].mxu0
    %1002 = vdwg.mxu0
    %1003 = vmatprep.subr.bf16.mxu0 0
    %1004 = vmatpush1.bf16.msra.mxu0 %v873
    %1005 = vmatprep.subr.bf16.mxu0 0
    %1006 = vmatpush1.bf16.msra.mxu0 %v874
    %1007 = vmatprep.subr.bf16.mxu0 0
    %1008 = vmatpush1.bf16.msra.mxu0 %v875
    %1009 = vmatprep.subr.bf16.mxu0 0
    %1010 = vmatpush1.bf16.msra.mxu0 %v876
    %1011 = vmatprep.subr.bf16.mxu0 0
    %1012 = vmatpush1.bf16.msra.mxu0 %v877
    %1013 = vmatprep.subr.bf16.mxu0 0
    %1014 = vmatpush1.bf16.msra.mxu0 %v878
    %1015 = vmatprep.subr.bf16.mxu0 0
    %1016 = vmatpush1.bf16.msra.mxu0 %v879
    %1017 = vmatprep.subr.bf16.mxu0 0
    %1018 = vmatpush1.bf16.msra.mxu0 %v880
    %1019 = vmatprep.subr.bf16.mxu0 0
    %1020 = vmatpush1.bf16.msra.mxu0 0
    %1021 = vmatprep.subr.bf16.mxu0 0
    %1022 = vmatpush1.bf16.msra.mxu0 0
    %1023 = vmatprep.subr.bf16.mxu0 0
    %1024 = vmatpush1.bf16.msra.mxu0 0
    %1025 = vmatprep.subr.bf16.mxu0 0
    %1026 = vmatpush1.bf16.msra.mxu0 0
    %1027 = vmatprep.subr.bf16.mxu0 0
    %1028 = vmatpush1.bf16.msra.mxu0 0
    %1029 = vmatprep.subr.bf16.mxu0 0
    %1030 = vmatpush1.bf16.msra.mxu0 0
    %1031 = vmatprep.subr.bf16.mxu0 0
    %1032 = vmatpush1.bf16.msra.mxu0 0
    %1033 = vmatprep.subr.bf16.mxu0 0
    %1034 = vmatpush1.bf16.msra.mxu0 0
    %1035 = vmatprep.mubr.bf16.mxu0 0
    %1036 = vmatmul.mubr.bf16.gmra.mrb[0].mxu0 %v675
    %v1037 = vpop.f32.mrb[0].mxu0
    %v1038 = vadd.f32 %v997, %v1037
    %v1039 = vpop.f32.mrb[0].mxu0
    %v1040 = vpop.f32.mrb[0].mxu0
    %v1041 = vadd.f32 %v1000, %v1040
    %v1042 = vpop.f32.mrb[0].mxu0
    %1043 = vdwg.mxu0
    %v1044 = vtanh.pop %v1038
    %v1045 = vtanh.pop %v1041
    %v1046 = vpack.c.bf16 %v1045, %v1044
    %1047 = vst [vmem:[#allocation2 + $0x8] sm:$0xff] %v1046
    %v1048 = vld [vmem:[#allocation3 + $0x18] sm:$0xff]
    %v1049 = vld [vmem:[#allocation3 + $0x20] sm:$0xff]
    %v1050 = vld [vmem:[#allocation3 + $0x28] sm:$0xf]
    %v1051 = vld [vmem:[#allocation3 + $0x58] sm:$0xff]
    %v1052 = vld [vmem:[#allocation3 + $0x60] sm:$0xff]
    %v1053 = vld [vmem:[#allocation3 + $0x68] sm:$0xf]
    %v1054 = vld [vmem:[#allocation6] sm:$0xf]
    %v1055 = vld [vmem:[#allocation6 + $0x4] sm:$0xf]
    %v1056 = vld [vmem:[#allocation6 + $0x8] sm:$0xf]
    %v1057 = vld [vmem:[#allocation6 + $0xc] sm:$0xf]
    %v1058 = vld [vmem:[#allocation6 + $0x10] sm:$0xf]
    %v1059 = vld [vmem:[#allocation6 + $0x14] sm:$0xf]
    %v1060 = vld [vmem:[#allocation6 + $0x18] sm:$0xf]
    %v1061 = vld [vmem:[#allocation6 + $0x1c] sm:$0xf]
    %v1062 = vld [vmem:[#allocation6 + $0x20] sm:$0xf]
    %v1063 = vld [vmem:[#allocation6 + $0x24] sm:$0xf]
    %v1064 = vld [vmem:[#allocation6 + $0x28] sm:$0xf]
    %v1065 = vld [vmem:[#allocation6 + $0x2c] sm:$0xf]
    %v1066 = vld [vmem:[#allocation6 + $0x30] sm:$0xf]
    %v1067 = vld [vmem:[#allocation6 + $0x34] sm:$0xf]
    %v1068 = vld [vmem:[#allocation6 + $0x38] sm:$0xf]
    %v1069 = vld [vmem:[#allocation6 + $0x3c] sm:$0xf]
    %v1070 = vld [vmem:[#allocation6 + $0x40] sm:$0xf]
    %v1071 = vld [vmem:[#allocation6 + $0x44] sm:$0xf]
    %v1072 = vld [vmem:[#allocation6 + $0x48] sm:$0xf]
    %v1073 = vld [vmem:[#allocation6 + $0x4c] sm:$0xf]
    %v1074 = vld [vmem:[#allocation6 + $0x50] sm:$0xf]
    %v1075 = vld [vmem:[#allocation6 + $0x54] sm:$0xf]
    %v1076 = vld [vmem:[#allocation6 + $0x58] sm:$0xf]
    %v1077 = vld [vmem:[#allocation6 + $0x5c] sm:$0xf]
    %v1078 = vld [vmem:[#allocation6 + $0x60] sm:$0xf]
    %v1079 = vld [vmem:[#allocation6 + $0x64] sm:$0xf]
    %v1080 = vld [vmem:[#allocation6 + $0x68] sm:$0xf]
    %v1081 = vld [vmem:[#allocation6 + $0x6c] sm:$0xf]
    %v1082 = vld [vmem:[#allocation6 + $0x70] sm:$0xf]
    %v1083 = vld [vmem:[#allocation6 + $0x74] sm:$0xf]
    %v1084 = vld [vmem:[#allocation6 + $0x78] sm:$0xf]
    %v1085 = vld [vmem:[#allocation6 + $0x7c] sm:$0xf]
    %v1086 = vld [vmem:[#allocation6 + $0x80] sm:$0xf]
    %v1087 = vld [vmem:[#allocation6 + $0x84] sm:$0xf]
    %v1088 = vld [vmem:[#allocation6 + $0x88] sm:$0xf]
    %v1089 = vld [vmem:[#allocation6 + $0x8c] sm:$0xf]
    %v1090 = vld [vmem:[#allocation6 + $0x90] sm:$0xf]
    %v1091 = vld [vmem:[#allocation6 + $0x94] sm:$0xf]
    %v1092 = vld [vmem:[#allocation6 + $0x98] sm:$0xf]
    %v1093 = vld [vmem:[#allocation6 + $0x9c] sm:$0xf]
    %v1094 = vld [vmem:[#allocation6 + $0xa0] sm:$0xf]
    %v1095 = vld [vmem:[#allocation6 + $0xa4] sm:$0xf]
    %v1096 = vld [vmem:[#allocation6 + $0xa8] sm:$0xf]
    %v1097 = vld [vmem:[#allocation6 + $0xac] sm:$0xf]
    %v1098 = vld [vmem:[#allocation6 + $0xb0] sm:$0xf]
    %v1099 = vld [vmem:[#allocation6 + $0xb4] sm:$0xf]
    %v1100 = vld [vmem:[#allocation6 + $0xb8] sm:$0xf]
    %v1101 = vld [vmem:[#allocation6 + $0xbc] sm:$0xf]
    %v1102 = vld [vmem:[#allocation6 + $0xc0] sm:$0xf]
    %v1103 = vld [vmem:[#allocation6 + $0xc4] sm:$0xf]
    %v1104 = vld [vmem:[#allocation6 + $0xc8] sm:$0xf]
    %v1105 = vld [vmem:[#allocation6 + $0xcc] sm:$0xf]
    %v1106 = vld [vmem:[#allocation6 + $0xd0] sm:$0xf]
    %v1107 = vld [vmem:[#allocation6 + $0xd4] sm:$0xf]
    %v1108 = vld [vmem:[#allocation6 + $0xd8] sm:$0xf]
    %v1109 = vld [vmem:[#allocation6 + $0xdc] sm:$0xf]
    %v1110 = vld [vmem:[#allocation6 + $0xe0] sm:$0xf]
    %v1111 = vld [vmem:[#allocation6 + $0xe4] sm:$0xf]
    %v1112 = vld [vmem:[#allocation6 + $0xe8] sm:$0xf]
    %v1113 = vld [vmem:[#allocation6 + $0xec] sm:$0xf]
    %v1114 = vld [vmem:[#allocation6 + $0xf0] sm:$0xf]
    %v1115 = vld [vmem:[#allocation6 + $0xf4] sm:$0xf]
    %v1116 = vld [vmem:[#allocation6 + $0xf8] sm:$0xf]
    %v1117 = vld [vmem:[#allocation6 + $0xfc] sm:$0xf]
    %v1118 = vld [vmem:[#allocation6 + $0x100] sm:$0xf]
    %v1119 = vld [vmem:[#allocation6 + $0x104] sm:$0xf]
    %v1120 = vld [vmem:[#allocation6 + $0x108] sm:$0xf]
    %v1121 = vld [vmem:[#allocation6 + $0x10c] sm:$0xf]
    %v1122 = vld [vmem:[#allocation6 + $0x110] sm:$0xf]
    %v1123 = vld [vmem:[#allocation6 + $0x114] sm:$0xf]
    %v1124 = vld [vmem:[#allocation6 + $0x118] sm:$0xf]
    %v1125 = vld [vmem:[#allocation6 + $0x11c] sm:$0xf]
    %v1126 = vld [vmem:[#allocation6 + $0x120] sm:$0xf]
    %v1127 = vld [vmem:[#allocation6 + $0x124] sm:$0xf]
    %v1128 = vld [vmem:[#allocation6 + $0x128] sm:$0xf]
    %v1129 = vld [vmem:[#allocation6 + $0x12c] sm:$0xf]
    %v1130 = vld [vmem:[#allocation6 + $0x130] sm:$0xf]
    %v1131 = vld [vmem:[#allocation6 + $0x134] sm:$0xf]
    %v1132 = vld [vmem:[#allocation6 + $0x138] sm:$0xf]
    %v1133 = vld [vmem:[#allocation6 + $0x13c] sm:$0xf]
    %v1140 = vunpack.c.l.b16 %v1048
    %v1141 = vunpack.c.h.b16 %v1048
    %v1142 = vunpack.c.l.b16 %v1049
    %v1143 = vunpack.c.h.b16 %v1049
    %v1144 = vunpack.c.l.b16 %v1050
    %v1145 = vunpack.c.l.b16 %v1051
    %v1146 = vunpack.c.h.b16 %v1051
    %v1147 = vunpack.c.l.b16 %v1052
    %v1148 = vunpack.c.h.b16 %v1052
    %v1149 = vunpack.c.l.b16 %v1053
    %v1150 = vpack.c.b16 %v1145, %v1140
    %v1151 = vpack.c.b16 %v1146, %v1141
    %v1152 = vpack.c.b16 %v1147, %v1142
    %v1153 = vpack.c.b16 %v1148, %v1143
    %v1154 = vpack.c.b16 %v1149, %v1144
    %v1240 = vunpack.c.l.b16 %v1054
    %v1241 = vunpack.c.l.b16 %v1055
    %v1242 = vunpack.c.l.b16 %v1056
    %v1243 = vunpack.c.l.b16 %v1057
    %v1244 = vunpack.c.l.b16 %v1058
    %v1245 = vunpack.c.l.b16 %v1059
    %v1246 = vunpack.c.l.b16 %v1060
    %v1247 = vunpack.c.l.b16 %v1061
    %v1248 = vunpack.c.l.b16 %v1062
    %v1249 = vunpack.c.l.b16 %v1063
    %v1250 = vunpack.c.l.b16 %v1064
    %v1251 = vunpack.c.l.b16 %v1065
    %v1252 = vunpack.c.l.b16 %v1066
    %v1253 = vunpack.c.l.b16 %v1067
    %v1254 = vunpack.c.l.b16 %v1068
    %v1255 = vunpack.c.l.b16 %v1069
    %v1256 = vunpack.c.l.b16 %v1070
    %v1257 = vunpack.c.l.b16 %v1071
    %v1258 = vunpack.c.l.b16 %v1072
    %v1259 = vunpack.c.l.b16 %v1073
    %v1260 = vunpack.c.l.b16 %v1074
    %v1261 = vunpack.c.l.b16 %v1075
    %v1262 = vunpack.c.l.b16 %v1076
    %v1263 = vunpack.c.l.b16 %v1077
    %v1264 = vunpack.c.l.b16 %v1078
    %v1265 = vunpack.c.l.b16 %v1079
    %v1266 = vunpack.c.l.b16 %v1080
    %v1267 = vunpack.c.l.b16 %v1081
    %v1268 = vunpack.c.l.b16 %v1082
    %v1269 = vunpack.c.l.b16 %v1083
    %v1270 = vunpack.c.l.b16 %v1084
    %v1271 = vunpack.c.l.b16 %v1085
    %v1272 = vunpack.c.l.b16 %v1086
    %v1273 = vunpack.c.l.b16 %v1087
    %v1274 = vunpack.c.l.b16 %v1088
    %v1275 = vunpack.c.l.b16 %v1089
    %v1276 = vunpack.c.l.b16 %v1090
    %v1277 = vunpack.c.l.b16 %v1091
    %v1278 = vunpack.c.l.b16 %v1092
    %v1279 = vunpack.c.l.b16 %v1093
    %v1280 = vunpack.c.l.b16 %v1094
    %v1281 = vunpack.c.l.b16 %v1095
    %v1282 = vunpack.c.l.b16 %v1096
    %v1283 = vunpack.c.l.b16 %v1097
    %v1284 = vunpack.c.l.b16 %v1098
    %v1285 = vunpack.c.l.b16 %v1099
    %v1286 = vunpack.c.l.b16 %v1100
    %v1287 = vunpack.c.l.b16 %v1101
    %v1288 = vunpack.c.l.b16 %v1102
    %v1289 = vunpack.c.l.b16 %v1103
    %v1290 = vunpack.c.l.b16 %v1104
    %v1291 = vunpack.c.l.b16 %v1105
    %v1292 = vunpack.c.l.b16 %v1106
    %v1293 = vunpack.c.l.b16 %v1107
    %v1294 = vunpack.c.l.b16 %v1108
    %v1295 = vunpack.c.l.b16 %v1109
    %v1296 = vunpack.c.l.b16 %v1110
    %v1297 = vunpack.c.l.b16 %v1111
    %v1298 = vunpack.c.l.b16 %v1112
    %v1299 = vunpack.c.l.b16 %v1113
    %v1300 = vunpack.c.l.b16 %v1114
    %v1301 = vunpack.c.l.b16 %v1115
    %v1302 = vunpack.c.l.b16 %v1116
    %v1303 = vunpack.c.l.b16 %v1117
    %v1304 = vunpack.c.l.b16 %v1118
    %v1305 = vunpack.c.l.b16 %v1119
    %v1306 = vunpack.c.l.b16 %v1120
    %v1307 = vunpack.c.l.b16 %v1121
    %v1308 = vunpack.c.l.b16 %v1122
    %v1309 = vunpack.c.l.b16 %v1123
    %v1310 = vunpack.c.l.b16 %v1124
    %v1311 = vunpack.c.l.b16 %v1125
    %v1312 = vunpack.c.l.b16 %v1126
    %v1313 = vunpack.c.l.b16 %v1127
    %v1314 = vunpack.c.l.b16 %v1128
    %v1315 = vunpack.c.l.b16 %v1129
    %v1316 = vunpack.c.l.b16 %v1130
    %v1317 = vunpack.c.l.b16 %v1131
    %v1318 = vunpack.c.l.b16 %v1132
    %v1319 = vunpack.c.l.b16 %v1133
    %v1320 = vpack.c.b16 %v1241, %v1240
    %v1321 = vpack.c.b16 %v1243, %v1242
    %v1322 = vpack.c.b16 %v1245, %v1244
    %v1323 = vpack.c.b16 %v1247, %v1246
    %v1324 = vpack.c.b16 %v1249, %v1248
    %v1325 = vpack.c.b16 %v1251, %v1250
    %v1326 = vpack.c.b16 %v1253, %v1252
    %v1327 = vpack.c.b16 %v1255, %v1254
    %v1328 = vpack.c.b16 %v1257, %v1256
    %v1329 = vpack.c.b16 %v1259, %v1258
    %v1330 = vpack.c.b16 %v1261, %v1260
    %v1331 = vpack.c.b16 %v1263, %v1262
    %v1332 = vpack.c.b16 %v1265, %v1264
    %v1333 = vpack.c.b16 %v1267, %v1266
    %v1334 = vpack.c.b16 %v1269, %v1268
    %v1335 = vpack.c.b16 %v1271, %v1270
    %v1336 = vpack.c.b16 %v1273, %v1272
    %v1337 = vpack.c.b16 %v1275, %v1274
    %v1338 = vpack.c.b16 %v1277, %v1276
    %v1339 = vpack.c.b16 %v1279, %v1278
    %v1340 = vpack.c.b16 %v1281, %v1280
    %v1341 = vpack.c.b16 %v1283, %v1282
    %v1342 = vpack.c.b16 %v1285, %v1284
    %v1343 = vpack.c.b16 %v1287, %v1286
    %v1344 = vpack.c.b16 %v1289, %v1288
    %v1345 = vpack.c.b16 %v1291, %v1290
    %v1346 = vpack.c.b16 %v1293, %v1292
    %v1347 = vpack.c.b16 %v1295, %v1294
    %v1348 = vpack.c.b16 %v1297, %v1296
    %v1349 = vpack.c.b16 %v1299, %v1298
    %v1350 = vpack.c.b16 %v1301, %v1300
    %v1351 = vpack.c.b16 %v1303, %v1302
    %v1352 = vpack.c.b16 %v1305, %v1304
    %v1353 = vpack.c.b16 %v1307, %v1306
    %v1354 = vpack.c.b16 %v1309, %v1308
    %v1355 = vpack.c.b16 %v1311, %v1310
    %v1356 = vpack.c.b16 %v1313, %v1312
    %v1357 = vpack.c.b16 %v1315, %v1314
    %v1358 = vpack.c.b16 %v1317, %v1316
    %v1359 = vpack.c.b16 %v1319, %v1318
    %1400 = vmatprep.subr.bf16.mxu0 0
    %1401 = vmatpush1.bf16.msra.mxu0 %v1320
    %1402 = vmatprep.subr.bf16.mxu0 0
    %1403 = vmatpush1.bf16.msra.mxu0 %v1321
    %1404 = vmatprep.subr.bf16.mxu0 0
    %1405 = vmatpush1.bf16.msra.mxu0 %v1322
    %1406 = vmatprep.subr.bf16.mxu0 0
    %1407 = vmatpush1.bf16.msra.mxu0 %v1323
    %1408 = vmatprep.subr.bf16.mxu0 0
    %1409 = vmatpush1.bf16.msra.mxu0 %v1324
    %1410 = vmatprep.subr.bf16.mxu0 0
    %1411 = vmatpush1.bf16.msra.mxu0 %v1325
    %1412 = vmatprep.subr.bf16.mxu0 0
    %1413 = vmatpush1.bf16.msra.mxu0 %v1326
    %1414 = vmatprep.subr.bf16.mxu0 0
    %1415 = vmatpush1.bf16.msra.mxu0 %v1327
    %1416 = vmatprep.subr.bf16.mxu0 0
    %1417 = vmatpush1.bf16.msra.mxu0 %v1328
    %1418 = vmatprep.subr.bf16.mxu0 0
    %1419 = vmatpush1.bf16.msra.mxu0 %v1329
    %1420 = vmatprep.subr.bf16.mxu0 0
    %1421 = vmatpush1.bf16.msra.mxu0 %v1330
    %1422 = vmatprep.subr.bf16.mxu0 0
    %1423 = vmatpush1.bf16.msra.mxu0 %v1331
    %1424 = vmatprep.subr.bf16.mxu0 0
    %1425 = vmatpush1.bf16.msra.mxu0 %v1332
    %1426 = vmatprep.subr.bf16.mxu0 0
    %1427 = vmatpush1.bf16.msra.mxu0 %v1333
    %1428 = vmatprep.subr.bf16.mxu0 0
    %1429 = vmatpush1.bf16.msra.mxu0 %v1334
    %1430 = vmatprep.subr.bf16.mxu0 0
    %1431 = vmatpush1.bf16.msra.mxu0 %v1335
    %1432 = vmatprep.mubr.bf16.mxu0 %v1151
    %1433 = vmatmul.mubr.bf16.gmra.mrb[0].mxu0 %v1150
    %v1434 = vpop.f32.mrb[0].mxu0
    %v1435 = vadd.f32 %v174, %v1434
    %v1436 = vpop.f32.mrb[0].mxu0
    %v1437 = vpop.f32.mrb[0].mxu0
    %v1438 = vadd.f32 %v174, %v1437
    %v1439 = vpop.f32.mrb[0].mxu0
    %1440 = vdwg.mxu0
    %1441 = vmatprep.subr.bf16.mxu0 0
    %1442 = vmatpush1.bf16.msra.mxu0 %v1336
    %1443 = vmatprep.subr.bf16.mxu0 0
    %1444 = vmatpush1.bf16.msra.mxu0 %v1337
    %1445 = vmatprep.subr.bf16.mxu0 0
    %1446 = vmatpush1.bf16.msra.mxu0 %v1338
    %1447 = vmatprep.subr.bf16.mxu0 0
    %1448 = vmatpush1.bf16.msra.mxu0 %v1339
    %1449 = vmatprep.subr.bf16.mxu0 0
    %1450 = vmatpush1.bf16.msra.mxu0 %v1340
    %1451 = vmatprep.subr.bf16.mxu0 0
    %1452 = vmatpush1.bf16.msra.mxu0 %v1341
    %1453 = vmatprep.subr.bf16.mxu0 0
    %1454 = vmatpush1.bf16.msra.mxu0 %v1342
    %1455 = vmatprep.subr.bf16.mxu0 0
    %1456 = vmatpush1.bf16.msra.mxu0 %v1343
    %1457 = vmatprep.subr.bf16.mxu0 0
    %1458 = vmatpush1.bf16.msra.mxu0 %v1344
    %1459 = vmatprep.subr.bf16.mxu0 0
    %1460 = vmatpush1.bf16.msra.mxu0 %v1345
    %1461 = vmatprep.subr.bf16.mxu0 0
    %1462 = vmatpush1.bf16.msra.mxu0 %v1346
    %1463 = vmatprep.subr.bf16.mxu0 0
    %1464 = vmatpush1.bf16.msra.mxu0 %v1347
    %1465 = vmatprep.subr.bf16.mxu0 0
    %1466 = vmatpush1.bf16.msra.mxu0 %v1348
    %1467 = vmatprep.subr.bf16.mxu0 0
    %1468 = vmatpush1.bf16.msra.mxu0 %v1349
    %1469 = vmatprep.subr.bf16.mxu0 0
    %1470 = vmatpush1.bf16.msra.mxu0 %v1350
    %1471 = vmatprep.subr.bf16.mxu0 0
    %1472 = vmatpush1.bf16.msra.mxu0 %v1351
    %1473 = vmatprep.mubr.bf16.mxu0 %v1153
    %1474 = vmatmul.mubr.bf16.gmra.mrb[0].mxu0 %v1152
    %v1475 = vpop.f32.mrb[0].mxu0
    %v1476 = vadd.f32 %v1435, %v1475
    %v1477 = vpop.f32.mrb[0].mxu0
    %v1478 = vpop.f32.mrb[0].mxu0
    %v1479 = vadd.f32 %v1438, %v1478
    %v1480 = vpop.f32.mrb[0].mxu0
    %1481 = vdwg.mxu0
    %1482 = vmatprep.subr.bf16.mxu0 0
    %1483 = vmatpush1.bf16.msra.mxu0 %v1352
    %1484 = vmatprep.subr.bf16.mxu0 0
    %1485 = vmatpush1.bf16.msra.mxu0 %v1353
    %1486 = vmatprep.subr.bf16.mxu0 0
    %1487 = vmatpush1.bf16.msra.mxu0 %v1354
    %1488 = vmatprep.subr.bf16.mxu0 0
    %1489 = vmatpush1.bf16.msra.mxu0 %v1355
    %1490 = vmatprep.subr.bf16.mxu0 0
    %1491 = vmatpush1.bf16.msra.mxu0 %v1356
    %1492 = vmatprep.subr.bf16.mxu0 0
    %1493 = vmatpush1.bf16.msra.mxu0 %v1357
    %1494 = vmatprep.subr.bf16.mxu0 0
    %1495 = vmatpush1.bf16.msra.mxu0 %v1358
    %1496 = vmatprep.subr.bf16.mxu0 0
    %1497 = vmatpush1.bf16.msra.mxu0 %v1359
    %1498 = vmatprep.subr.bf16.mxu0 0
    %1499 = vmatpush1.bf16.msra.mxu0 0
    %1500 = vmatprep.subr.bf16.mxu0 0
    %1501 = vmatpush1.bf16.msra.mxu0 0
    %1502 = vmatprep.subr.bf16.mxu0 0
    %1503 = vmatpush1.bf16.msra.mxu0 0
    %1504 = vmatprep.subr.bf16.mxu0 0
    %1505 = vmatpush1.bf16.msra.mxu0 0
    %1506 = vmatprep.subr.bf16.mxu0 0
    %1507 = vmatpush1.bf16.msra.mxu0 0
    %1508 = vmatprep.subr.bf16.mxu0 0
    %1509 = vmatpush1.bf16.msra.mxu0 0
    %1510 = vmatprep.subr.bf16.mxu0 0
    %1511 = vmatpush1.bf16.msra.mxu0 0
    %1512 = vmatprep.subr.bf16.mxu0 0
    %1513 = vmatpush1.bf16.msra.mxu0 0
    %1514 = vmatprep.mubr.bf16.mxu0 0
    %1515 = vmatmul.mubr.bf16.gmra.mrb[0].mxu0 %v1154
    %v1516 = vpop.f32.mrb[0].mxu0
    %v1517 = vadd.f32 %v1476, %v1516
    %v1518 = vpop.f32.mrb[0].mxu0
    %v1519 = vpop.f32.mrb[0].mxu0
    %v1520 = vadd.f32 %v1479, %v1519
    %v1521 = vpop.f32.mrb[0].mxu0
    %1522 = vdwg.mxu0
    %v1523 = vtanh.pop %v1517
    %v1524 = vtanh.pop %v1520
    %v1525 = vpack.c.bf16 %v1524, %v1523
    %1526 = vst [vmem:[#allocation2 + $0x10] sm:$0xff] %v1525
    %v1527 = vld [vmem:[#allocation3 + $0x24] sm:$0xff]
    %v1528 = vld [vmem:[#allocation3 + $0x2c] sm:$0xff]
    %v1529 = vld [vmem:[#allocation3 + $0x34] sm:$0xf]
    %v1530 = vld [vmem:[#allocation3 + $0x64] sm:$0xff]
    %v1531 = vld [vmem:[#allocation3 + $0x6c] sm:$0xff]
    %v1532 = vld [vmem:[#allocation3 + $0x74] sm:$0xf]
    %v1533 = vld [vmem:[#allocation6] sm:$0xf]
    %v1534 = vld [vmem:[#allocation6 + $0x4] sm:$0xf]
    %v1535 = vld [vmem:[#allocation6 + $0x8] sm:$0xf]
    %v1536 = vld [vmem:[#allocation6 + $0xc] sm:$0xf]
    %v1537 = vld [vmem:[#allocation6 + $0x10] sm:$0xf]
    %v1538 = vld [vmem:[#allocation6 + $0x14] sm:$0xf]
    %v1539 = vld [vmem:[#allocation6 + $0x18] sm:$0xf]
    %v1540 = vld [vmem:[#allocation6 + $0x1c] sm:$0xf]
    %v1541 = vld [vmem:[#allocation6 + $0x20] sm:$0xf]
    %v1542 = vld [vmem:[#allocation6 + $0x24] sm:$0xf]
    %v1543 = vld [vmem:[#allocation6 + $0x28] sm:$0xf]
    %v1544 = vld [vmem:[#allocation6 + $0x2c] sm:$0xf]
    %v1545 = vld [vmem:[#allocation6 + $0x30] sm:$0xf]
    %v1546 = vld [vmem:[#allocation6 + $0x34] sm:$0xf]
    %v1547 = vld [vmem:[#allocation6 + $0x38] sm:$0xf]
    %v1548 = vld [vmem:[#allocation6 + $0x3c] sm:$0xf]
    %v1549 = vld [vmem:[#allocation6 + $0x40] sm:$0xf]
    %v1550 = vld [vmem:[#allocation6 + $0x44] sm:$0xf]
    %v1551 = vld [vmem:[#allocation6 + $0x48] sm:$0xf]
    %v1552 = vld [vmem:[#allocation6 + $0x4c] sm:$0xf]
    %v1553 = vld [vmem:[#allocation6 + $0x50] sm:$0xf]
    %v1554 = vld [vmem:[#allocation6 + $0x54] sm:$0xf]
    %v1555 = vld [vmem:[#allocation6 + $0x58] sm:$0xf]
    %v1556 = vld [vmem:[#allocation6 + $0x5c] sm:$0xf]
    %v1557 = vld [vmem:[#allocation6 + $0x60] sm:$0xf]
    %v1558 = vld [vmem:[#allocation6 + $0x64] sm:$0xf]
    %v1559 = vld [vmem:[#allocation6 + $0x68] sm:$0xf]
    %v1560 = vld [vmem:[#allocation6 + $0x6c] sm:$0xf]
    %v1561 = vld [vmem:[#allocation6 + $0x70] sm:$0xf]
    %v1562 = vld [vmem:[#allocation6 + $0x74] sm:$0xf]
    %v1563 = vld [vmem:[#allocation6 + $0x78] sm:$0xf]
    %v1564 = vld [vmem:[#allocation6 + $0x7c] sm:$0xf]
    %v1565 = vld [vmem:[#allocation6 + $0x80] sm:$0xf]
    %v1566 = vld [vmem:[#allocation6 + $0x84] sm:$0xf]
    %v1567 = vld [vmem:[#allocation6 + $0x88] sm:$0xf]
    %v1568 = vld [vmem:[#allocation6 + $0x8c] sm:$0xf]
    %v1569 = vld [vmem:[#allocation6 + $0x90] sm:$0xf]
    %v1570 = vld [vmem:[#allocation6 + $0x94] sm:$0xf]
    %v1571 = vld [vmem:[#allocation6 + $0x98] sm:$0xf]
    %v1572 = vld [vmem:[#allocation6 + $0x9c] sm:$0xf]
    %v1573 = vld [vmem:[#allocation6 + $0xa0] sm:$0xf]
    %v1574 = vld [vmem:[#allocation6 + $0xa4] sm:$0xf]
    %v1575 = vld [vmem:[#allocation6 + $0xa8] sm:$0xf]
    %v1576 = vld [vmem:[#allocation6 + $0xac] sm:$0xf]
    %v1577 = vld [vmem:[#allocation6 + $0xb0] sm:$0xf]
    %v1578 = vld [vmem:[#allocation6 + $0xb4] sm:$0xf]
    %v1579 = vld [vmem:[#allocation6 + $0xb8] sm:$0xf]
    %v1580 = vld [vmem:[#allocation6 + $0xbc] sm:$0xf]
    %v1581 = vld [vmem:[#allocation6 + $0xc0] sm:$0xf]
    %v1582 = vld [vmem:[#allocation6 + $0xc4] sm:$0xf]
    %v1583 = vld [vmem:[#allocation6 + $0xc8] sm:$0xf]
    %v1584 = vld [vmem:[#allocation6 + $0xcc] sm:$0xf]
    %v1585 = vld [vmem:[#allocation6 + $0xd0] sm:$0xf]
    %v1586 = vld [vmem:[#allocation6 + $0xd4] sm:$0xf]
    %v1587 = vld [vmem:[#allocation6 + $0xd8] sm:$0xf]
    %v1588 = vld [vmem:[#allocation6 + $0xdc] sm:$0xf]
    %v1589 = vld [vmem:[#allocation6 + $0xe0] sm:$0xf]
    %v1590 = vld [vmem:[#allocation6 + $0xe4] sm:$0xf]
    %v1591 = vld [vmem:[#allocation6 + $0xe8] sm:$0xf]
    %v1592 = vld [vmem:[#allocation6 + $0xec] sm:$0xf]
    %v1593 = vld [vmem:[#allocation6 + $0xf0] sm:$0xf]
    %v1594 = vld [vmem:[#allocation6 + $0xf4] sm:$0xf]
    %v1595 = vld [vmem:[#allocation6 + $0xf8] sm:$0xf]
    %v1596 = vld [vmem:[#allocation6 + $0xfc] sm:$0xf]
    %v1597 = vld [vmem:[#allocation6 + $0x100] sm:$0xf]
    %v1598 = vld [vmem:[#allocation6 + $0x104] sm:$0xf]
    %v1599 = vld [vmem:[#allocation6 + $0x108] sm:$0xf]
    %v1600 = vld [vmem:[#allocation6 + $0x10c] sm:$0xf]
    %v1601 = vld [vmem:[#allocation6 + $0x110] sm:$0xf]
    %v1602 = vld [vmem:[#allocation6 + $0x114] sm:$0xf]
    %v1603 = vld [vmem:[#allocation6 + $0x118] sm:$0xf]
    %v1604 = vld [vmem:[#allocation6 + $0x11c] sm:$0xf]
    %v1605 = vld [vmem:[#allocation6 + $0x120] sm:$0xf]
    %v1606 = vld [vmem:[#allocation6 + $0x124] sm:$0xf]
    %v1607 = vld [vmem:[#allocation6 + $0x128] sm:$0xf]
    %v1608 = vld [vmem:[#allocation6 + $0x12c] sm:$0xf]
    %v1609 = vld [vmem:[#allocation6 + $0x130] sm:$0xf]
    %v1610 = vld [vmem:[#allocation6 + $0x134] sm:$0xf]
    %v1611 = vld [vmem:[#allocation6 + $0x138] sm:$0xf]
    %v1612 = vld [vmem:[#allocation6 + $0x13c] sm:$0xf]
    %v1619 = vunpack.c.l.b16 %v1527
    %v1620 = vunpack.c.h.b16 %v1527
    %v1621 = vunpack.c.l.b16 %v1528
    %v1622 = vunpack.c.h.b16 %v1528
    %v1623 = vunpack.c.l.b16 %v1529
    %v1624 = vunpack.c.l.b16 %v1530
    %v1625 = vunpack.c.h.b16 %v1530
    %v1626 = vunpack.c.l.b16 %v1531
    %v1627 = vunpack.c.h.b16 %v1531
    %v1628 = vunpack.c.l.b16 %v1532
    %v1629 = vpack.c.b16 %v1624, %v1619
    %v1630 = vpack.c.b16 %v1625, %v1620
    %v1631 = vpack.c.b16 %v1626, %v1621
    %v1632 = vpack.c.b16 %v1627, %v1622
    %v1633 = vpack.c.b16 %v1628, %v1623
    %v1719 = vunpack.c.l.b16 %v1533
    %v1720 = vunpack.c.l.b16 %v1534
    %v1721 = vunpack.c.l.b16 %v1535
    %v1722 = vunpack.c.l.b16 %v1536
    %v1723 = vunpack.c.l.b16 %v1537
    %v1724 = vunpack.c.l.b16 %v1538
    %v1725 = vunpack.c.l.b16 %v1539
    %v1726 = vunpack.c.l.b16 %v1540
    %v1727 = vunpack.c.l.b16 %v1541
    %v1728 = vunpack.c.l.b16 %v1542
    %v1729 = vunpack.c.l.b16 %v1543
    %v1730 = vunpack.c.l.b16 %v1544
    %v1731 = vunpack.c.l.b16 %v1545
    %v1732 = vunpack.c.l.b16 %v1546
    %v1733 = vunpack.c.l.b16 %v1547
    %v1734 = vunpack.c.l.b16 %v1548
    %v1735 = vunpack.c.l.b16 %v1549
    %v1736 = vunpack.c.l.b16 %v1550
    %v1737 = vunpack.c.l.b16 %v1551
    %v1738 = vunpack.c.l.b16 %v1552
    %v1739 = vunpack.c.l.b16 %v1553
    %v1740 = vunpack.c.l.b16 %v1554
    %v1741 = vunpack.c.l.b16 %v1555
    %v1742 = vunpack.c.l.b16 %v1556
    %v1743 = vunpack.c.l.b16 %v1557
    %v1744 = vunpack.c.l.b16 %v1558
    %v1745 = vunpack.c.l.b16 %v1559
    %v1746 = vunpack.c.l.b16 %v1560
    %v1747 = vunpack.c.l.b16 %v1561
    %v1748 = vunpack.c.l.b16 %v1562
    %v1749 = vunpack.c.l.b16 %v1563
    %v1750 = vunpack.c.l.b16 %v1564
    %v1751 = vunpack.c.l.b16 %v1565
    %v1752 = vunpack.c.l.b16 %v1566
    %v1753 = vunpack.c.l.b16 %v1567
    %v1754 = vunpack.c.l.b16 %v1568
    %v1755 = vunpack.c.l.b16 %v1569
    %v1756 = vunpack.c.l.b16 %v1570
    %v1757 = vunpack.c.l.b16 %v1571
    %v1758 = vunpack.c.l.b16 %v1572
    %v1759 = vunpack.c.l.b16 %v1573
    %v1760 = vunpack.c.l.b16 %v1574
    %v1761 = vunpack.c.l.b16 %v1575
    %v1762 = vunpack.c.l.b16 %v1576
    %v1763 = vunpack.c.l.b16 %v1577
    %v1764 = vunpack.c.l.b16 %v1578
    %v1765 = vunpack.c.l.b16 %v1579
    %v1766 = vunpack.c.l.b16 %v1580
    %v1767 = vunpack.c.l.b16 %v1581
    %v1768 = vunpack.c.l.b16 %v1582
    %v1769 = vunpack.c.l.b16 %v1583
    %v1770 = vunpack.c.l.b16 %v1584
    %v1771 = vunpack.c.l.b16 %v1585
    %v1772 = vunpack.c.l.b16 %v1586
    %v1773 = vunpack.c.l.b16 %v1587
    %v1774 = vunpack.c.l.b16 %v1588
    %v1775 = vunpack.c.l.b16 %v1589
    %v1776 = vunpack.c.l.b16 %v1590
    %v1777 = vunpack.c.l.b16 %v1591
    %v1778 = vunpack.c.l.b16 %v1592
    %v1779 = vunpack.c.l.b16 %v1593
    %v1780 = vunpack.c.l.b16 %v1594
    %v1781 = vunpack.c.l.b16 %v1595
    %v1782 = vunpack.c.l.b16 %v1596
    %v1783 = vunpack.c.l.b16 %v1597
    %v1784 = vunpack.c.l.b16 %v1598
    %v1785 = vunpack.c.l.b16 %v1599
    %v1786 = vunpack.c.l.b16 %v1600
    %v1787 = vunpack.c.l.b16 %v1601
    %v1788 = vunpack.c.l.b16 %v1602
    %v1789 = vunpack.c.l.b16 %v1603
    %v1790 = vunpack.c.l.b16 %v1604
    %v1791 = vunpack.c.l.b16 %v1605
    %v1792 = vunpack.c.l.b16 %v1606
    %v1793 = vunpack.c.l.b16 %v1607
    %v1794 = vunpack.c.l.b16 %v1608
    %v1795 = vunpack.c.l.b16 %v1609
    %v1796 = vunpack.c.l.b16 %v1610
    %v1797 = vunpack.c.l.b16 %v1611
    %v1798 = vunpack.c.l.b16 %v1612
    %v1799 = vpack.c.b16 %v1720, %v1719
    %v1800 = vpack.c.b16 %v1722, %v1721
    %v1801 = vpack.c.b16 %v1724, %v1723
    %v1802 = vpack.c.b16 %v1726, %v1725
    %v1803 = vpack.c.b16 %v1728, %v1727
    %v1804 = vpack.c.b16 %v1730, %v1729
    %v1805 = vpack.c.b16 %v1732, %v1731
    %v1806 = vpack.c.b16 %v1734, %v1733
    %v1807 = vpack.c.b16 %v1736, %v1735
    %v1808 = vpack.c.b16 %v1738, %v1737
    %v1809 = vpack.c.b16 %v1740, %v1739
    %v1810 = vpack.c.b16 %v1742, %v1741
    %v1811 = vpack.c.b16 %v1744, %v1743
    %v1812 = vpack.c.b16 %v1746, %v1745
    %v1813 = vpack.c.b16 %v1748, %v1747
    %v1814 = vpack.c.b16 %v1750, %v1749
    %v1815 = vpack.c.b16 %v1752, %v1751
    %v1816 = vpack.c.b16 %v1754, %v1753
    %v1817 = vpack.c.b16 %v1756, %v1755
    %v1818 = vpack.c.b16 %v1758, %v1757
    %v1819 = vpack.c.b16 %v1760, %v1759
    %v1820 = vpack.c.b16 %v1762, %v1761
    %v1821 = vpack.c.b16 %v1764, %v1763
    %v1822 = vpack.c.b16 %v1766, %v1765
    %v1823 = vpack.c.b16 %v1768, %v1767
    %v1824 = vpack.c.b16 %v1770, %v1769
    %v1825 = vpack.c.b16 %v1772, %v1771
    %v1826 = vpack.c.b16 %v1774, %v1773
    %v1827 = vpack.c.b16 %v1776, %v1775
    %v1828 = vpack.c.b16 %v1778, %v1777
    %v1829 = vpack.c.b16 %v1780, %v1779
    %v1830 = vpack.c.b16 %v1782, %v1781
    %v1831 = vpack.c.b16 %v1784, %v1783
    %v1832 = vpack.c.b16 %v1786, %v1785
    %v1833 = vpack.c.b16 %v1788, %v1787
    %v1834 = vpack.c.b16 %v1790, %v1789
    %v1835 = vpack.c.b16 %v1792, %v1791
    %v1836 = vpack.c.b16 %v1794, %v1793
    %v1837 = vpack.c.b16 %v1796, %v1795
    %v1838 = vpack.c.b16 %v1798, %v1797
    %1879 = vmatprep.subr.bf16.mxu0 0
    %1880 = vmatpush1.bf16.msra.mxu0 %v1799
    %1881 = vmatprep.subr.bf16.mxu0 0
    %1882 = vmatpush1.bf16.msra.mxu0 %v1800
    %1883 = vmatprep.subr.bf16.mxu0 0
    %1884 = vmatpush1.bf16.msra.mxu0 %v1801
    %1885 = vmatprep.subr.bf16.mxu0 0
    %1886 = vmatpush1.bf16.msra.mxu0 %v1802
    %1887 = vmatprep.subr.bf16.mxu0 0
    %1888 = vmatpush1.bf16.msra.mxu0 %v1803
    %1889 = vmatprep.subr.bf16.mxu0 0
    %1890 = vmatpush1.bf16.msra.mxu0 %v1804
    %1891 = vmatprep.subr.bf16.mxu0 0
    %1892 = vmatpush1.bf16.msra.mxu0 %v1805
    %1893 = vmatprep.subr.bf16.mxu0 0
    %1894 = vmatpush1.bf16.msra.mxu0 %v1806
    %1895 = vmatprep.subr.bf16.mxu0 0
    %1896 = vmatpush1.bf16.msra.mxu0 %v1807
    %1897 = vmatprep.subr.bf16.mxu0 0
    %1898 = vmatpush1.bf16.msra.mxu0 %v1808
    %1899 = vmatprep.subr.bf16.mxu0 0
    %1900 = vmatpush1.bf16.msra.mxu0 %v1809
    %1901 = vmatprep.subr.bf16.mxu0 0
    %1902 = vmatpush1.bf16.msra.mxu0 %v1810
    %1903 = vmatprep.subr.bf16.mxu0 0
    %1904 = vmatpush1.bf16.msra.mxu0 %v1811
    %1905 = vmatprep.subr.bf16.mxu0 0
    %1906 = vmatpush1.bf16.msra.mxu0 %v1812
    %1907 = vmatprep.subr.bf16.mxu0 0
    %1908 = vmatpush1.bf16.msra.mxu0 %v1813
    %1909 = vmatprep.subr.bf16.mxu0 0
    %1910 = vmatpush1.bf16.msra.mxu0 %v1814
    %1911 = vmatprep.mubr.bf16.mxu0 %v1630
    %1912 = vmatmul.mubr.bf16.gmra.mrb[0].mxu0 %v1629
    %v1913 = vpop.f32.mrb[0].mxu0
    %v1914 = vadd.f32 %v174, %v1913
    %v1915 = vpop.f32.mrb[0].mxu0
    %v1916 = vpop.f32.mrb[0].mxu0
    %v1917 = vadd.f32 %v174, %v1916
    %v1918 = vpop.f32.mrb[0].mxu0
    %1919 = vdwg.mxu0
    %1920 = vmatprep.subr.bf16.mxu0 0
    %1921 = vmatpush1.bf16.msra.mxu0 %v1815
    %1922 = vmatprep.subr.bf16.mxu0 0
    %1923 = vmatpush1.bf16.msra.mxu0 %v1816
    %1924 = vmatprep.subr.bf16.mxu0 0
    %1925 = vmatpush1.bf16.msra.mxu0 %v1817
    %1926 = vmatprep.subr.bf16.mxu0 0
    %1927 = vmatpush1.bf16.msra.mxu0 %v1818
    %1928 = vmatprep.subr.bf16.mxu0 0
    %1929 = vmatpush1.bf16.msra.mxu0 %v1819
    %1930 = vmatprep.subr.bf16.mxu0 0
    %1931 = vmatpush1.bf16.msra.mxu0 %v1820
    %1932 = vmatprep.subr.bf16.mxu0 0
    %1933 = vmatpush1.bf16.msra.mxu0 %v1821
    %1934 = vmatprep.subr.bf16.mxu0 0
    %1935 = vmatpush1.bf16.msra.mxu0 %v1822
    %1936 = vmatprep.subr.bf16.mxu0 0
    %1937 = vmatpush1.bf16.msra.mxu0 %v1823
    %1938 = vmatprep.subr.bf16.mxu0 0
    %1939 = vmatpush1.bf16.msra.mxu0 %v1824
    %1940 = vmatprep.subr.bf16.mxu0 0
    %1941 = vmatpush1.bf16.msra.mxu0 %v1825
    %1942 = vmatprep.subr.bf16.mxu0 0
    %1943 = vmatpush1.bf16.msra.mxu0 %v1826
    %1944 = vmatprep.subr.bf16.mxu0 0
    %1945 = vmatpush1.bf16.msra.mxu0 %v1827
    %1946 = vmatprep.subr.bf16.mxu0 0
    %1947 = vmatpush1.bf16.msra.mxu0 %v1828
    %1948 = vmatprep.subr.bf16.mxu0 0
    %1949 = vmatpush1.bf16.msra.mxu0 %v1829
    %1950 = vmatprep.subr.bf16.mxu0 0
    %1951 = vmatpush1.bf16.msra.mxu0 %v1830
    %1952 = vmatprep.mubr.bf16.mxu0 %v1632
    %1953 = vmatmul.mubr.bf16.gmra.mrb[0].mxu0 %v1631
    %v1954 = vpop.f32.mrb[0].mxu0
    %v1955 = vadd.f32 %v1914, %v1954
    %v1956 = vpop.f32.mrb[0].mxu0
    %v1957 = vpop.f32.mrb[0].mxu0
    %v1958 = vadd.f32 %v1917, %v1957
    %v1959 = vpop.f32.mrb[0].mxu0
    %1960 = vdwg.mxu0
    %1961 = vmatprep.subr.bf16.mxu0 0
    %1962 = vmatpush1.bf16.msra.mxu0 %v1831
    %1963 = vmatprep.subr.bf16.mxu0 0
    %1964 = vmatpush1.bf16.msra.mxu0 %v1832
    %1965 = vmatprep.subr.bf16.mxu0 0
    %1966 = vmatpush1.bf16.msra.mxu0 %v1833
    %1967 = vmatprep.subr.bf16.mxu0 0
    %1968 = vmatpush1.bf16.msra.mxu0 %v1834
    %1969 = vmatprep.subr.bf16.mxu0 0
    %1970 = vmatpush1.bf16.msra.mxu0 %v1835
    %1971 = vmatprep.subr.bf16.mxu0 0
    %1972 = vmatpush1.bf16.msra.mxu0 %v1836
    %1973 = vmatprep.subr.bf16.mxu0 0
    %1974 = vmatpush1.bf16.msra.mxu0 %v1837
    %1975 = vmatprep.subr.bf16.mxu0 0
    %1976 = vmatpush1.bf16.msra.mxu0 %v1838
    %1977 = vmatprep.subr.bf16.mxu0 0
    %1978 = vmatpush1.bf16.msra.mxu0 0
    %1979 = vmatprep.subr.bf16.mxu0 0
    %1980 = vmatpush1.bf16.msra.mxu0 0
    %1981 = vmatprep.subr.bf16.mxu0 0
    %1982 = vmatpush1.bf16.msra.mxu0 0
    %1983 = vmatprep.subr.bf16.mxu0 0
    %1984 = vmatpush1.bf16.msra.mxu0 0
    %1985 = vmatprep.subr.bf16.mxu0 0
    %1986 = vmatpush1.bf16.msra.mxu0 0
    %1987 = vmatprep.subr.bf16.mxu0 0
    %1988 = vmatpush1.bf16.msra.mxu0 0
    %1989 = vmatprep.subr.bf16.mxu0 0
    %1990 = vmatpush1.bf16.msra.mxu0 0
    %1991 = vmatprep.subr.bf16.mxu0 0
    %1992 = vmatpush1.bf16.msra.mxu0 0
    %1993 = vmatprep.mubr.bf16.mxu0 0
    %1994 = vmatmul.mubr.bf16.gmra.mrb[0].mxu0 %v1633
    %v1995 = vpop.f32.mrb[0].mxu0
    %v1996 = vadd.f32 %v1955, %v1995
    %v1997 = vpop.f32.mrb[0].mxu0
    %v1998 = vpop.f32.mrb[0].mxu0
    %v1999 = vadd.f32 %v1958, %v1998
    %v2000 = vpop.f32.mrb[0].mxu0
    %2001 = vdwg.mxu0
    %v2002 = vtanh.pop %v1996
    %v2003 = vtanh.pop %v1999
    %v2004 = vpack.c.bf16 %v2003, %v2002
    %2005 = vst [vmem:[#allocation2 + $0x18] sm:$0xff] %v2004
    %v2006 = vld [vmem:[#allocation2] sm:$0xff]
    %v2007 = vld [vmem:[#allocation8] sm:$0xf]
    %v2008 = vld [vmem:[#allocation8 + $0x4] sm:$0xf]
    %v2009 = vld [vmem:[#allocation8 + $0x8] sm:$0xf]
    %v2010 = vld [vmem:[#allocation8 + $0xc] sm:$0xf]
    %v2011 = vld [vmem:[#allocation8 + $0x10] sm:$0xf]
    %v2012 = vld [vmem:[#allocation8 + $0x14] sm:$0xf]
    %v2013 = vld [vmem:[#allocation8 + $0x18] sm:$0xf]
    %v2014 = vld [vmem:[#allocation8 + $0x1c] sm:$0xf]
    %v2015 = vld [vmem:[#allocation8 + $0x20] sm:$0xf]
    %v2016 = vld [vmem:[#allocation8 + $0x24] sm:$0xf]
    %v2017 = vld [vmem:[#allocation8 + $0x28] sm:$0xf]
    %v2018 = vld [vmem:[#allocation8 + $0x2c] sm:$0xf]
    %v2019 = vld [vmem:[#allocation8 + $0x30] sm:$0xf]
    %v2020 = vld [vmem:[#allocation8 + $0x34] sm:$0xf]
    %v2021 = vld [vmem:[#allocation8 + $0x38] sm:$0xf]
    %v2022 = vld [vmem:[#allocation8 + $0x3c] sm:$0xf]
    %v2023 = vld [vmem:[#allocation2 + $0x8] sm:$0xff]
    %s2024 = scalar_lea.vmem [#allocation8], 64
    %v2025 = vld [vmem:[%s2024] sm:$0xf]
    %v2026 = vld [vmem:[%s2024 + $0x4] sm:$0xf]
    %v2027 = vld [vmem:[%s2024 + $0x8] sm:$0xf]
    %v2028 = vld [vmem:[%s2024 + $0xc] sm:$0xf]
    %v2029 = vld [vmem:[%s2024 + $0x10] sm:$0xf]
    %v2030 = vld [vmem:[%s2024 + $0x14] sm:$0xf]
    %v2031 = vld [vmem:[%s2024 + $0x18] sm:$0xf]
    %v2032 = vld [vmem:[%s2024 + $0x1c] sm:$0xf]
    %v2033 = vld [vmem:[%s2024 + $0x20] sm:$0xf]
    %v2034 = vld [vmem:[%s2024 + $0x24] sm:$0xf]
    %v2035 = vld [vmem:[%s2024 + $0x28] sm:$0xf]
    %v2036 = vld [vmem:[%s2024 + $0x2c] sm:$0xf]
    %v2037 = vld [vmem:[%s2024 + $0x30] sm:$0xf]
    %v2038 = vld [vmem:[%s2024 + $0x34] sm:$0xf]
    %v2039 = vld [vmem:[%s2024 + $0x38] sm:$0xf]
    %v2040 = vld [vmem:[%s2024 + $0x3c] sm:$0xf]
    %v2057 = vunpack.c.l.b16 %v2025
    %v2058 = vunpack.c.l.b16 %v2026
    %v2059 = vunpack.c.l.b16 %v2027
    %v2060 = vunpack.c.l.b16 %v2028
    %v2061 = vunpack.c.l.b16 %v2029
    %v2062 = vunpack.c.l.b16 %v2030
    %v2063 = vunpack.c.l.b16 %v2031
    %v2064 = vunpack.c.l.b16 %v2032
    %v2065 = vunpack.c.l.b16 %v2033
    %v2066 = vunpack.c.l.b16 %v2034
    %v2067 = vunpack.c.l.b16 %v2035
    %v2068 = vunpack.c.l.b16 %v2036
    %v2069 = vunpack.c.l.b16 %v2037
    %v2070 = vunpack.c.l.b16 %v2038
    %v2071 = vunpack.c.l.b16 %v2039
    %v2072 = vunpack.c.l.b16 %v2040
    %v2073 = vpack.c.b16 %v2058, %v2057
    %v2074 = vpack.c.b16 %v2060, %v2059
    %v2075 = vpack.c.b16 %v2062, %v2061
    %v2076 = vpack.c.b16 %v2064, %v2063
    %v2077 = vpack.c.b16 %v2066, %v2065
    %v2078 = vpack.c.b16 %v2068, %v2067
    %v2079 = vpack.c.b16 %v2070, %v2069
    %v2080 = vpack.c.b16 %v2072, %v2071
    %2089 = vmatprep.subr.bf16.mxu0 0
    %2090 = vmatpush1.bf16.msra.mxu0 %v2073
    %2091 = vmatprep.subr.bf16.mxu0 0
    %2092 = vmatpush1.bf16.msra.mxu0 %v2074
    %2093 = vmatprep.subr.bf16.mxu0 0
    %2094 = vmatpush1.bf16.msra.mxu0 %v2075
    %2095 = vmatprep.subr.bf16.mxu0 0
    %2096 = vmatpush1.bf16.msra.mxu0 %v2076
    %2097 = vmatprep.subr.bf16.mxu0 0
    %2098 = vmatpush1.bf16.msra.mxu0 %v2077
    %2099 = vmatprep.subr.bf16.mxu0 0
    %2100 = vmatpush1.bf16.msra.mxu0 %v2078
    %2101 = vmatprep.subr.bf16.mxu0 0
    %2102 = vmatpush1.bf16.msra.mxu0 %v2079
    %2103 = vmatprep.subr.bf16.mxu0 0
    %2104 = vmatpush1.bf16.msra.mxu0 %v2080
    %2105 = vmatprep.subr.bf16.mxu0 0
    %2106 = vmatpush1.bf16.msra.mxu0 0
    %2107 = vmatprep.subr.bf16.mxu0 0
    %2108 = vmatpush1.bf16.msra.mxu0 0
    %2109 = vmatprep.subr.bf16.mxu0 0
    %2110 = vmatpush1.bf16.msra.mxu0 0
    %2111 = vmatprep.subr.bf16.mxu0 0
    %2112 = vmatpush1.bf16.msra.mxu0 0
    %2113 = vmatprep.subr.bf16.mxu0 0
    %2114 = vmatpush1.bf16.msra.mxu0 0
    %2115 = vmatprep.subr.bf16.mxu0 0
    %2116 = vmatpush1.bf16.msra.mxu0 0
    %2117 = vmatprep.subr.bf16.mxu0 0
    %2118 = vmatpush1.bf16.msra.mxu0 0
    %2119 = vmatprep.subr.bf16.mxu0 0
    %2120 = vmatpush1.bf16.msra.mxu0 0
    %2121 = vmatprep.mubr.bf16.mxu0 0
    %2122 = vmatmul.mubr.bf16.gmra.mrb[0].mxu0 %v2023
    %v2123 = vpop.f32.mrb[0].mxu0
    %v2124 = vadd.f32 0.0, %v2123
    %v2125 = vpop.f32.mrb[0].mxu0
    %v2126 = vpop.f32.mrb[0].mxu0
    %v2127 = vadd.f32 0.0, %v2126
    %v2128 = vpop.f32.mrb[0].mxu0
    %2129 = vdwg.mxu0
    %v2146 = vunpack.c.l.b16 %v2007
    %v2147 = vunpack.c.l.b16 %v2008
    %v2148 = vunpack.c.l.b16 %v2009
    %v2149 = vunpack.c.l.b16 %v2010
    %v2150 = vunpack.c.l.b16 %v2011
    %v2151 = vunpack.c.l.b16 %v2012
    %v2152 = vunpack.c.l.b16 %v2013
    %v2153 = vunpack.c.l.b16 %v2014
    %v2154 = vunpack.c.l.b16 %v2015
    %v2155 = vunpack.c.l.b16 %v2016
    %v2156 = vunpack.c.l.b16 %v2017
    %v2157 = vunpack.c.l.b16 %v2018
    %v2158 = vunpack.c.l.b16 %v2019
    %v2159 = vunpack.c.l.b16 %v2020
    %v2160 = vunpack.c.l.b16 %v2021
    %v2161 = vunpack.c.l.b16 %v2022
    %v2162 = vpack.c.b16 %v2147, %v2146
    %v2163 = vpack.c.b16 %v2149, %v2148
    %v2164 = vpack.c.b16 %v2151, %v2150
    %v2165 = vpack.c.b16 %v2153, %v2152
    %v2166 = vpack.c.b16 %v2155, %v2154
    %v2167 = vpack.c.b16 %v2157, %v2156
    %v2168 = vpack.c.b16 %v2159, %v2158
    %v2169 = vpack.c.b16 %v2161, %v2160
    %2178 = vmatprep.subr.bf16.mxu0 0
    %2179 = vmatpush1.bf16.msra.mxu0 %v2162
    %2180 = vmatprep.subr.bf16.mxu0 0
    %2181 = vmatpush1.bf16.msra.mxu0 %v2163
    %2182 = vmatprep.subr.bf16.mxu0 0
    %2183 = vmatpush1.bf16.msra.mxu0 %v2164
    %2184 = vmatprep.subr.bf16.mxu0 0
    %2185 = vmatpush1.bf16.msra.mxu0 %v2165
    %2186 = vmatprep.subr.bf16.mxu0 0
    %2187 = vmatpush1.bf16.msra.mxu0 %v2166
    %2188 = vmatprep.subr.bf16.mxu0 0
    %2189 = vmatpush1.bf16.msra.mxu0 %v2167
    %2190 = vmatprep.subr.bf16.mxu0 0
    %2191 = vmatpush1.bf16.msra.mxu0 %v2168
    %2192 = vmatprep.subr.bf16.mxu0 0
    %2193 = vmatpush1.bf16.msra.mxu0 %v2169
    %2194 = vmatprep.subr.bf16.mxu0 0
    %2195 = vmatpush1.bf16.msra.mxu0 0
    %2196 = vmatprep.subr.bf16.mxu0 0
    %2197 = vmatpush1.bf16.msra.mxu0 0
    %2198 = vmatprep.subr.bf16.mxu0 0
    %2199 = vmatpush1.bf16.msra.mxu0 0
    %2200 = vmatprep.subr.bf16.mxu0 0
    %2201 = vmatpush1.bf16.msra.mxu0 0
    %2202 = vmatprep.subr.bf16.mxu0 0
    %2203 = vmatpush1.bf16.msra.mxu0 0
    %2204 = vmatprep.subr.bf16.mxu0 0
    %2205 = vmatpush1.bf16.msra.mxu0 0
    %2206 = vmatprep.subr.bf16.mxu0 0
    %2207 = vmatpush1.bf16.msra.mxu0 0
    %2208 = vmatprep.subr.bf16.mxu0 0
    %2209 = vmatpush1.bf16.msra.mxu0 0
    %2210 = vmatprep.mubr.bf16.mxu0 0
    %2211 = vmatmul.mubr.bf16.gmra.mrb[0].mxu0 %v2006
    %v2212 = vpop.f32.mrb[0].mxu0
    %v2213 = vadd.f32 %v2124, %v2212
    %v2214 = vpop.f32.mrb[0].mxu0
    %v2215 = vpop.f32.mrb[0].mxu0
    %v2216 = vadd.f32 %v2127, %v2215
    %v2217 = vpop.f32.mrb[0].mxu0
    %2218 = vdwg.mxu0
    %v2219 = vld [vmem:[#allocation2 + $0x10] sm:$0xff]
    %s2220 = scalar_lea.vmem [#allocation8], 128
    %v2221 = vld [vmem:[%s2220] sm:$0xf]
    %v2222 = vld [vmem:[%s2220 + $0x4] sm:$0xf]
    %v2223 = vld [vmem:[%s2220 + $0x8] sm:$0xf]
    %v2224 = vld [vmem:[%s2220 + $0xc] sm:$0xf]
    %v2225 = vld [vmem:[%s2220 + $0x10] sm:$0xf]
    %v2226 = vld [vmem:[%s2220 + $0x14] sm:$0xf]
    %v2227 = vld [vmem:[%s2220 + $0x18] sm:$0xf]
    %v2228 = vld [vmem:[%s2220 + $0x1c] sm:$0xf]
    %v2229 = vld [vmem:[%s2220 + $0x20] sm:$0xf]
    %v2230 = vld [vmem:[%s2220 + $0x24] sm:$0xf]
    %v2231 = vld [vmem:[%s2220 + $0x28] sm:$0xf]
    %v2232 = vld [vmem:[%s2220 + $0x2c] sm:$0xf]
    %v2233 = vld [vmem:[%s2220 + $0x30] sm:$0xf]
    %v2234 = vld [vmem:[%s2220 + $0x34] sm:$0xf]
    %v2235 = vld [vmem:[%s2220 + $0x38] sm:$0xf]
    %v2236 = vld [vmem:[%s2220 + $0x3c] sm:$0xf]
    %v2253 = vunpack.c.l.b16 %v2221
    %v2254 = vunpack.c.l.b16 %v2222
    %v2255 = vunpack.c.l.b16 %v2223
    %v2256 = vunpack.c.l.b16 %v2224
    %v2257 = vunpack.c.l.b16 %v2225
    %v2258 = vunpack.c.l.b16 %v2226
    %v2259 = vunpack.c.l.b16 %v2227
    %v2260 = vunpack.c.l.b16 %v2228
    %v2261 = vunpack.c.l.b16 %v2229
    %v2262 = vunpack.c.l.b16 %v2230
    %v2263 = vunpack.c.l.b16 %v2231
    %v2264 = vunpack.c.l.b16 %v2232
    %v2265 = vunpack.c.l.b16 %v2233
    %v2266 = vunpack.c.l.b16 %v2234
    %v2267 = vunpack.c.l.b16 %v2235
    %v2268 = vunpack.c.l.b16 %v2236
    %v2269 = vpack.c.b16 %v2254, %v2253
    %v2270 = vpack.c.b16 %v2256, %v2255
    %v2271 = vpack.c.b16 %v2258, %v2257
    %v2272 = vpack.c.b16 %v2260, %v2259
    %v2273 = vpack.c.b16 %v2262, %v2261
    %v2274 = vpack.c.b16 %v2264, %v2263
    %v2275 = vpack.c.b16 %v2266, %v2265
    %v2276 = vpack.c.b16 %v2268, %v2267
    %2285 = vmatprep.subr.bf16.mxu0 0
    %2286 = vmatpush1.bf16.msra.mxu0 %v2269
    %2287 = vmatprep.subr.bf16.mxu0 0
    %2288 = vmatpush1.bf16.msra.mxu0 %v2270
    %2289 = vmatprep.subr.bf16.mxu0 0
    %2290 = vmatpush1.bf16.msra.mxu0 %v2271
    %2291 = vmatprep.subr.bf16.mxu0 0
    %2292 = vmatpush1.bf16.msra.mxu0 %v2272
    %2293 = vmatprep.subr.bf16.mxu0 0
    %2294 = vmatpush1.bf16.msra.mxu0 %v2273
    %2295 = vmatprep.subr.bf16.mxu0 0
    %2296 = vmatpush1.bf16.msra.mxu0 %v2274
    %2297 = vmatprep.subr.bf16.mxu0 0
    %2298 = vmatpush1.bf16.msra.mxu0 %v2275
    %2299 = vmatprep.subr.bf16.mxu0 0
    %2300 = vmatpush1.bf16.msra.mxu0 %v2276
    %2301 = vmatprep.subr.bf16.mxu0 0
    %2302 = vmatpush1.bf16.msra.mxu0 0
    %2303 = vmatprep.subr.bf16.mxu0 0
    %2304 = vmatpush1.bf16.msra.mxu0 0
    %2305 = vmatprep.subr.bf16.mxu0 0
    %2306 = vmatpush1.bf16.msra.mxu0 0
    %2307 = vmatprep.subr.bf16.mxu0 0
    %2308 = vmatpush1.bf16.msra.mxu0 0
    %2309 = vmatprep.subr.bf16.mxu0 0
    %2310 = vmatpush1.bf16.msra.mxu0 0
    %2311 = vmatprep.subr.bf16.mxu0 0
    %2312 = vmatpush1.bf16.msra.mxu0 0
    %2313 = vmatprep.subr.bf16.mxu0 0
    %2314 = vmatpush1.bf16.msra.mxu0 0
    %2315 = vmatprep.subr.bf16.mxu0 0
    %2316 = vmatpush1.bf16.msra.mxu0 0
    %2317 = vmatprep.mubr.bf16.mxu0 0
    %2318 = vmatmul.mubr.bf16.gmra.mrb[0].mxu0 %v2219
    %v2319 = vpop.f32.mrb[0].mxu0
    %v2320 = vadd.f32 0.0, %v2319
    %v2321 = vpop.f32.mrb[0].mxu0
    %v2322 = vpop.f32.mrb[0].mxu0
    %v2323 = vadd.f32 0.0, %v2322
    %v2324 = vpop.f32.mrb[0].mxu0
    %2325 = vdwg.mxu0
    %v2326 = vadd.f32 %v2213, %v2320
    %v2327 = vadd.f32 %v2216, %v2323
    %v2328 = vld [vmem:[#allocation2 + $0x18] sm:$0xff]
    %s2329 = scalar_lea.vmem [#allocation8], 192
    %v2330 = vld [vmem:[%s2329] sm:$0xf]
    %v2331 = vld [vmem:[%s2329 + $0x4] sm:$0xf]
    %v2332 = vld [vmem:[%s2329 + $0x8] sm:$0xf]
    %v2333 = vld [vmem:[%s2329 + $0xc] sm:$0xf]
    %v2334 = vld [vmem:[%s2329 + $0x10] sm:$0xf]
    %v2335 = vld [vmem:[%s2329 + $0x14] sm:$0xf]
    %v2336 = vld [vmem:[%s2329 + $0x18] sm:$0xf]
    %v2337 = vld [vmem:[%s2329 + $0x1c] sm:$0xf]
    %v2338 = vld [vmem:[%s2329 + $0x20] sm:$0xf]
    %v2339 = vld [vmem:[%s2329 + $0x24] sm:$0xf]
    %v2340 = vld [vmem:[%s2329 + $0x28] sm:$0xf]
    %v2341 = vld [vmem:[%s2329 + $0x2c] sm:$0xf]
    %v2342 = vld [vmem:[%s2329 + $0x30] sm:$0xf]
    %v2343 = vld [vmem:[%s2329 + $0x34] sm:$0xf]
    %v2344 = vld [vmem:[%s2329 + $0x38] sm:$0xf]
    %v2345 = vld [vmem:[%s2329 + $0x3c] sm:$0xf]
    %v2362 = vunpack.c.l.b16 %v2330
    %v2363 = vunpack.c.l.b16 %v2331
    %v2364 = vunpack.c.l.b16 %v2332
    %v2365 = vunpack.c.l.b16 %v2333
    %v2366 = vunpack.c.l.b16 %v2334
    %v2367 = vunpack.c.l.b16 %v2335
    %v2368 = vunpack.c.l.b16 %v2336
    %v2369 = vunpack.c.l.b16 %v2337
    %v2370 = vunpack.c.l.b16 %v2338
    %v2371 = vunpack.c.l.b16 %v2339
    %v2372 = vunpack.c.l.b16 %v2340
    %v2373 = vunpack.c.l.b16 %v2341
    %v2374 = vunpack.c.l.b16 %v2342
    %v2375 = vunpack.c.l.b16 %v2343
    %v2376 = vunpack.c.l.b16 %v2344
    %v2377 = vunpack.c.l.b16 %v2345
    %v2378 = vpack.c.b16 %v2363, %v2362
    %v2379 = vpack.c.b16 %v2365, %v2364
    %v2380 = vpack.c.b16 %v2367, %v2366
    %v2381 = vpack.c.b16 %v2369, %v2368
    %v2382 = vpack.c.b16 %v2371, %v2370
    %v2383 = vpack.c.b16 %v2373, %v2372
    %v2384 = vpack.c.b16 %v2375, %v2374
    %v2385 = vpack.c.b16 %v2377, %v2376
    %2394 = vmatprep.subr.bf16.mxu0 0
    %2395 = vmatpush1.bf16.msra.mxu0 %v2378
    %2396 = vmatprep.subr.bf16.mxu0 0
    %2397 = vmatpush1.bf16.msra.mxu0 %v2379
    %2398 = vmatprep.subr.bf16.mxu0 0
    %2399 = vmatpush1.bf16.msra.mxu0 %v2380
    %2400 = vmatprep.subr.bf16.mxu0 0
    %2401 = vmatpush1.bf16.msra.mxu0 %v2381
    %2402 = vmatprep.subr.bf16.mxu0 0
    %2403 = vmatpush1.bf16.msra.mxu0 %v2382
    %2404 = vmatprep.subr.bf16.mxu0 0
    %2405 = vmatpush1.bf16.msra.mxu0 %v2383
    %2406 = vmatprep.subr.bf16.mxu0 0
    %2407 = vmatpush1.bf16.msra.mxu0 %v2384
    %2408 = vmatprep.subr.bf16.mxu0 0
    %2409 = vmatpush1.bf16.msra.mxu0 %v2385
    %2410 = vmatprep.subr.bf16.mxu0 0
    %2411 = vmatpush1.bf16.msra.mxu0 0
    %2412 = vmatprep.subr.bf16.mxu0 0
    %2413 = vmatpush1.bf16.msra.mxu0 0
    %2414 = vmatprep.subr.bf16.mxu0 0
    %2415 = vmatpush1.bf16.msra.mxu0 0
    %2416 = vmatprep.subr.bf16.mxu0 0
    %2417 = vmatpush1.bf16.msra.mxu0 0
    %2418 = vmatprep.subr.bf16.mxu0 0
    %2419 = vmatpush1.bf16.msra.mxu0 0
    %2420 = vmatprep.subr.bf16.mxu0 0
    %2421 = vmatpush1.bf16.msra.mxu0 0
    %2422 = vmatprep.subr.bf16.mxu0 0
    %2423 = vmatpush1.bf16.msra.mxu0 0
    %2424 = vmatprep.subr.bf16.mxu0 0
    %2425 = vmatpush1.bf16.msra.mxu0 0
    %2426 = vmatprep.mubr.bf16.mxu0 0
    %2427 = vmatmul.mubr.bf16.gmra.mrb[0].mxu0 %v2328
    %v2428 = vpop.f32.mrb[0].mxu0
    %v2429 = vadd.f32 0.0, %v2428
    %v2430 = vpop.f32.mrb[0].mxu0
    %v2431 = vpop.f32.mrb[0].mxu0
    %v2432 = vadd.f32 0.0, %v2431
    %v2433 = vpop.f32.mrb[0].mxu0
    %2434 = vdwg.mxu0
    %v2435 = vadd.f32 %v2326, %v2429
    %v2436 = vadd.f32 %v2327, %v2432
    %v2437 = vld [vmem:[%s4] sm:$0x1]
    %v2439 = vlaneseq
    %v2440 = vshrl.u32 %v2439, 7
    %v2441 = vsub.s32 0, %v2440
    %v2442 = vrot.slane %v2437, %v2441
    %v2444 = vadd.f32 %v2435, %v2442
    %v2445 = vadd.f32 %v2436, %v2442
    %v2446 = vtanh.pop %v2444
    %v2447 = vtanh.pop %v2445
    %v2448 = vpack.c.bf16 %v2447, %v2446
    %v2449 = vld [vmem:[#allocation9] sm:$0xf]
    %v2450 = vld [vmem:[#allocation9 + $0x4] sm:$0xf]
    %v2451 = vld [vmem:[#allocation9 + $0x8] sm:$0xf]
    %v2452 = vld [vmem:[#allocation9 + $0xc] sm:$0xf]
    %v2453 = vld [vmem:[#allocation9 + $0x10] sm:$0xf]
    %v2454 = vld [vmem:[#allocation9 + $0x14] sm:$0xf]
    %v2455 = vld [vmem:[#allocation9 + $0x18] sm:$0xf]
    %v2456 = vld [vmem:[#allocation9 + $0x1c] sm:$0xf]
    %v2457 = vld [vmem:[#allocation9 + $0x20] sm:$0xf]
    %v2458 = vld [vmem:[#allocation9 + $0x24] sm:$0xf]
    %v2459 = vld [vmem:[#allocation9 + $0x28] sm:$0xf]
    %v2460 = vld [vmem:[#allocation9 + $0x2c] sm:$0xf]
    %v2461 = vld [vmem:[#allocation9 + $0x30] sm:$0xf]
    %v2462 = vld [vmem:[#allocation9 + $0x34] sm:$0xf]
    %v2463 = vld [vmem:[#allocation9 + $0x38] sm:$0xf]
    %v2464 = vld [vmem:[#allocation9 + $0x3c] sm:$0xf]
    %v2465 = vld [vmem:[%s6] sm:$0x1]
    %v2467 = vlaneseq
    %v2468 = vshrl.u32 %v2467, 7
    %v2469 = vsub.s32 0, %v2468
    %v2470 = vrot.slane %v2465, %v2469
    %v2488 = vunpack.c.l.b16 %v2449
    %v2489 = vunpack.c.l.b16 %v2450
    %v2490 = vunpack.c.l.b16 %v2451
    %v2491 = vunpack.c.l.b16 %v2452
    %v2492 = vunpack.c.l.b16 %v2453
    %v2493 = vunpack.c.l.b16 %v2454
    %v2494 = vunpack.c.l.b16 %v2455
    %v2495 = vunpack.c.l.b16 %v2456
    %v2496 = vunpack.c.l.b16 %v2457
    %v2497 = vunpack.c.l.b16 %v2458
    %v2498 = vunpack.c.l.b16 %v2459
    %v2499 = vunpack.c.l.b16 %v2460
    %v2500 = vunpack.c.l.b16 %v2461
    %v2501 = vunpack.c.l.b16 %v2462
    %v2502 = vunpack.c.l.b16 %v2463
    %v2503 = vunpack.c.l.b16 %v2464
    %v2504 = vpack.c.b16 %v2489, %v2488
    %v2505 = vpack.c.b16 %v2491, %v2490
    %v2506 = vpack.c.b16 %v2493, %v2492
    %v2507 = vpack.c.b16 %v2495, %v2494
    %v2508 = vpack.c.b16 %v2497, %v2496
    %v2509 = vpack.c.b16 %v2499, %v2498
    %v2510 = vpack.c.b16 %v2501, %v2500
    %v2511 = vpack.c.b16 %v2503, %v2502
    %2520 = vmatprep.subr.bf16.mxu0 0
    %2521 = vmatpush1.bf16.msra.mxu0 %v2504
    %2522 = vmatprep.subr.bf16.mxu0 0
    %2523 = vmatpush1.bf16.msra.mxu0 %v2505
    %2524 = vmatprep.subr.bf16.mxu0 0
    %2525 = vmatpush1.bf16.msra.mxu0 %v2506
    %2526 = vmatprep.subr.bf16.mxu0 0
    %2527 = vmatpush1.bf16.msra.mxu0 %v2507
    %2528 = vmatprep.subr.bf16.mxu0 0
    %2529 = vmatpush1.bf16.msra.mxu0 %v2508
    %2530 = vmatprep.subr.bf16.mxu0 0
    %2531 = vmatpush1.bf16.msra.mxu0 %v2509
    %2532 = vmatprep.subr.bf16.mxu0 0
    %2533 = vmatpush1.bf16.msra.mxu0 %v2510
    %2534 = vmatprep.subr.bf16.mxu0 0
    %2535 = vmatpush1.bf16.msra.mxu0 %v2511
    %2536 = vmatprep.subr.bf16.mxu0 0
    %2537 = vmatpush1.bf16.msra.mxu0 0
    %2538 = vmatprep.subr.bf16.mxu0 0
    %2539 = vmatpush1.bf16.msra.mxu0 0
    %2540 = vmatprep.subr.bf16.mxu0 0
    %2541 = vmatpush1.bf16.msra.mxu0 0
    %2542 = vmatprep.subr.bf16.mxu0 0
    %2543 = vmatpush1.bf16.msra.mxu0 0
    %2544 = vmatprep.subr.bf16.mxu0 0
    %2545 = vmatpush1.bf16.msra.mxu0 0
    %2546 = vmatprep.subr.bf16.mxu0 0
    %2547 = vmatpush1.bf16.msra.mxu0 0
    %2548 = vmatprep.subr.bf16.mxu0 0
    %2549 = vmatpush1.bf16.msra.mxu0 0
    %2550 = vmatprep.subr.bf16.mxu0 0
    %2551 = vmatpush1.bf16.msra.mxu0 0
    %2552 = vmatprep.mubr.bf16.mxu0 0
    %2553 = vmatmul.mubr.bf16.gmra.mrb[0].mxu0 %v2448
    %v2554 = vpop.f32.mrb[0].mxu0
    %v2555 = vadd.f32 %v2470, %v2554
    %v2556 = vpop.f32.mrb[0].mxu0
    %v2557 = vpop.f32.mrb[0].mxu0
    %v2558 = vadd.f32 %v2470, %v2557
    %v2559 = vpop.f32.mrb[0].mxu0
    %2560 = vdwg.mxu0
    %2561 = vst [vmem:[#allocation11] sm:$0xff] %v2555
    %2562 = vst [vmem:[#allocation11 + $0x8] sm:$0xff] %v2558
    // Predicated region
    $region46: #{tpu_custom_call.1} parent=1 // pred_check
      _
    $region47: #{tpu_custom_call.1} parent=1 // pred_check_branch
      %2564 = sbr.rel (0) target = $region49
    $region48: #{tpu_custom_call.1} parent=1 // pred_region
      %s2566 = ssub.s32 256, 256
      %2567 = vsyncadd [#allocation5], %s2566
      %s2568 = sshll.u32 [#allocation11], 4
      %s2569 = int_to_ptr.vmem [resolvable:$true] %s2568
      %2574 = dma.vmem_to_hbm [thread:$0]  %s2569, 256, %s7, [#allocation5], 128, 128, 8
    $region49: #{tpu_custom_call.1} parent=1 // pred_fallthru
      _
    // Predicated region
    $region50: #{tpu_custom_call.1} parent=1 // pred_check
      _
    $region51: #{tpu_custom_call.1} parent=1 // pred_check_branch
      %2576 = sbr.rel (0) target = $region53
    $region52: #{tpu_custom_call.1} parent=1 // pred_region
      %2577 = dma.done [#allocation5], 256
    $region53: #{tpu_custom_call.1} parent=1 // pred_fallthru
      _
    %2578 = vsyncpa [#allocation4], 1
    %2579 = vsyncpa [#allocation7], 1
    %2580 = vsyncpa [#allocation10], 1
    %2581 = vsyncpa [#allocation5], 1

</llo_original>
